<compile_context>
chip_gen: v6e
topology: v6e:2x2x1
jax: 0.10.0
libtpu: 0.0.40
codegen_flags: <defaults>
</compile_context>

<pallas_src>
import functools

import jax
import jax.numpy as jnp
from jax.experimental import pallas as pl
from jax.experimental.pallas import tpu as pltpu


# ----------------------------------------------------------------------------
# Pallas kernels
# ----------------------------------------------------------------------------

def _depth_norm_kernel(d_ref, o_ref):
    # depth_to_disp(depth, normalize=False) == 1/depth, then per-view min/max
    # normalization to [-1, 1]: 2*(disp - min)/(max - min) - 1.  One grid step
    # == one view, so the block reductions are exactly per-view.
    disp = 1.0 / d_ref[...]                                   # (1, S, 128)
    mn = jnp.min(jnp.min(disp, axis=2, keepdims=True), axis=1, keepdims=True)
    mx = jnp.max(jnp.max(disp, axis=2, keepdims=True), axis=1, keepdims=True)
    # One reciprocal + multiply instead of a per-element divide; the max()
    # only guards the degenerate constant-depth view.
    scale = 2.0 * pl.reciprocal(jnp.maximum(mx - mn, 1e-20))
    o_ref[...] = (disp - mn) * scale - 1.0


def _fused_train_step_kernel(use_depth_loss, c_lat, kin, pp,
                             k_ref, bias_ref,
                             img_ref, disp_ref, noise_ref, rays_ref,
                             w_ei_ref, w_ed_ref, w_ul_ref, w_ur_ref, w_dec_ref,
                             loss_lat_ref, loss_img_ref):
    f32, bf16 = jnp.float32, jnp.bfloat16
    dot = functools.partial(jnp.dot, preferred_element_type=f32)

    img = img_ref[...]                                        # (kin, MT) f32
    disp = disp_ref[...]                                      # (pp,  MT) f32

    # ---- VAE-encode stand-in: image rows -> rgb latent rows (0:C), channel-
    #      folded disparity rows -> depth latent rows (C:2C).  Output stays
    #      channel-major so M is the 128-lane axis.
    lat8 = (dot(w_ei_ref[...], img.astype(bf16)) +
            dot(w_ed_ref[...], disp.astype(bf16)))            # (8, MT) f32

    # ---- UNet stand-in on the *clean* latents (matches the reference, which
    #      passes `latents` to pre_diffusion).  Hybrid-CFG collapsed: the
    #      (1+pose_gs) ray scale is folded into w_ur, the text guidance is the
    #      precomputed (8,1) bias (lane broadcast, never materialized over M).
    eps = (dot(w_ul_ref[...], lat8.astype(bf16)) +
           dot(w_ur_ref[...], rays_ref[...]) +
           bias_ref[...])                                     # (8, MT)

    # ---- add_noise + DDIM pred_original_sample collapsed:
    #        x0 = (sa*lat + so*noise - so*eps)/sa = lat + k*(noise - eps)
    #      (init_noise_sigma == 1 and scale_model_input is identity for DDIM).
    d_lat = k_ref[...] * (noise_ref[...] - eps)               # = x0 - clean lat
    x0 = lat8 + d_lat

    # ---- VAE-decode stand-in + SDS losses.  unpatchify is a pure permutation,
    #      so the SSE is computed directly on patch rows.
    dec = dot(w_dec_ref[...], x0.astype(bf16))                # (kin | 2*kin, MT)

    if use_depth_loss:
        loss_lat = jnp.sum(d_lat * d_lat)
        d_img = dec[:kin] - img
        loss_img = jnp.sum(d_img * d_img)
        dec_dep = dec[kin:]
        # depths_in replicates the disparity into 3 identical channels.
        for c in range(kin // pp):
            dd = dec_dep[c * pp:(c + 1) * pp] - disp
            loss_img = loss_img + jnp.sum(dd * dd)
    else:
        rgb_row = jax.lax.broadcasted_iota(jnp.int32, d_lat.shape, 0) < c_lat
        loss_lat = jnp.sum(jnp.where(rgb_row, d_lat * d_lat, 0.0))
        d_img = dec - img
        loss_img = jnp.sum(d_img * d_img)

    # Per-tile partial losses, written as lane-dense (1,8,128) blocks so the
    # grid axis stays "parallel" (v7x megacore); summed outside the kernel.
    loss_lat_ref[...] = jnp.full(loss_lat_ref.shape, loss_lat, f32)
    loss_img_ref[...] = jnp.full(loss_img_ref.shape, loss_img, f32)


# ----------------------------------------------------------------------------
# Glue: layout helpers, scheduler table, module wrapper
# ----------------------------------------------------------------------------

def _make_alphas_cumprod(num_train_timesteps=1000, beta_start=0.00085,
                         beta_end=0.012):
    # scaled_linear betas (Stable-Diffusion-style DDIM scheduler).
    betas = jnp.linspace(beta_start ** 0.5, beta_end ** 0.5,
                         num_train_timesteps, dtype=jnp.float32) ** 2
    return jnp.cumprod(1.0 - betas)


def _patchify_T(x, p=8):
    """NCHW -> (C*p*p, N*h*w) patch rows, transposed so the long M = N*h*w
    dimension is the 128-lane axis (lane-dense loads inside the kernel)."""
    N, C, H, W = x.shape
    x = x.reshape(N, C, H // p, p, W // p, p)
    x = jnp.transpose(x, (1, 3, 5, 0, 2, 4))        # C, p, p, N, h, w
    return x.reshape(C * p * p, N * (H // p) * (W // p))


def _pick_m_tile(M):
    for t in (2048, 1024, 512, 256, 128):
        if M % t == 0:
            return t
    return M


def _const_spec(arr):
    nd = arr.ndim
    return pl.BlockSpec(arr.shape, lambda i: (0,) * nd)


def _tile_spec(rows, mt):
    return pl.BlockSpec((rows, mt), lambda i: (0, i))


class MultiviewSDSPPRefinerPallas:
    """JAX/Pallas reproduction of MultiviewSDSPPRefiner.train_step."""

    def __init__(self, guidance_scale=10.0, guidance_type='hybrid',
                 use_depth_loss=False, num_train_timesteps=1000,
                 img_size=64, latent_channels=4, rays_channels=6,
                 text_dim=32, m_tile=None, seed=0):
        assert guidance_type == 'hybrid'
        self.guidance_scale = float(guidance_scale)
        self.use_depth_loss = bool(use_depth_loss)
        self.img_size = img_size
        self.p = 8                                   # VAE downsample factor
        self.latent_channels = latent_channels       # 4 rgb + 4 depth latents
        self.rays_channels = rays_channels
        self.rays_pad = 8 * ((rays_channels + 7) // 8)
        self.m_tile = m_tile                         # None -> auto (<= 2048)
        self.alphas_cumprod = _make_alphas_cumprod(num_train_timesteps)
        self.init_noise_sigma = 1.0                  # DDIM

        # Deterministic synthetic weights for the frozen submodule stand-ins.
        # TODO(synk): the real mvldm VAE/UNet/text-encoder are external
        # pretrained networks and are not reimplemented here.
        key = jax.random.PRNGKey(seed)
        k_enc, k_dec, k_unet, k_txt, k_noise, k_rays = jax.random.split(key, 6)
        p, C = self.p, latent_channels
        kin, pp = 3 * p * p, p * p
        unet_cin = 2 * C + rays_channels
        f32, bf16 = jnp.float32, jnp.bfloat16
        w_enc = 0.05 * jax.random.normal(k_enc, (kin, C), f32)
        w_dec = 0.05 * jax.random.normal(k_dec, (C, kin), f32)
        w_unet = 0.05 * jax.random.normal(k_unet, (unet_cin, 2 * C), f32)
        self.w_txt = 0.05 * jax.random.normal(k_txt, (text_dim, 2 * C), f32)
        self._noise_key = k_noise
        self._rays_key = k_rays

        pose_gs = self.guidance_scale / 3.0

        # --- kernel-friendly derived layouts (built once, pre-cast to bf16) --
        # depths_in replicates the disparity into 3 identical channels, so the
        # depth encode folds the three per-channel weight blocks (exact).
        w_enc_dep = w_enc[0:pp] + w_enc[pp:2 * pp] + w_enc[2 * pp:3 * pp]
        w_ei = jnp.zeros((2 * C, kin), f32).at[:C, :].set(w_enc.T)
        w_ed = jnp.zeros((2 * C, pp), f32).at[C:, :].set(w_enc_dep.T)
        self.w_enc_img = w_ei.astype(bf16)                    # (2C, kin)
        self.w_enc_dep = w_ed.astype(bf16)                    # (2C, pp)
        # UNet stand-in, latent part and ray part; the hybrid-CFG (1+pose_gs)
        # ray scale is folded into the ray weights (pose-uncond rays are zero).
        self.w_ul = w_unet[:2 * C].T.astype(bf16)             # (2C, 2C)
        w_ur = jnp.zeros((2 * C, self.rays_pad), f32)
        w_ur = w_ur.at[:, :rays_channels].set((1.0 + pose_gs) * w_unet[2 * C:].T)
        self.w_ur = w_ur.astype(bf16)                         # (2C, rays_pad)
        # Decoder padded with zero columns so it consumes the full (2C, M) x0;
        # when use_depth_loss the rgb and depth decoders are stacked into ONE
        # weight so a single MXU pass streams x0 (K=8 is shallow anyway).
        w_dec_rgb = jnp.zeros((kin, 2 * C), f32).at[:, :C].set(w_dec.T)
        if self.use_depth_loss:
            w_dec_dep = jnp.zeros((kin, 2 * C), f32).at[:, C:].set(w_dec.T)
            self.w_dec = jnp.concatenate([w_dec_rgb, w_dec_dep], 0).astype(bf16)
        else:
            self.w_dec = w_dec_rgb.astype(bf16)
        # (Encoder/decoder stand-in biases are zero and are folded away.)

    def get_rays_embeddings(self, N, h, w):
        # TODO(synk): sample_rays/embed_rays from camera matrices are not
        # reimplemented; a deterministic synthetic Pluecker-like embedding is
        # used.  uncond rays are zeros — exploited by the collapsed CFG.
        return jax.random.normal(self._rays_key,
                                 (N, self.rays_channels, h, w), jnp.float32)

    # --- the forward pass (train_step) -------------------------------------

    def train_step(self, images, depths, t, text_embeddings,
                   uncond_text_embeddings):
        f32, bf16 = jnp.float32, jnp.bfloat16
        N, _, H, W = images.shape
        p, C = self.p, self.latent_channels
        h, w = H // p, W // p
        M = N * h * w
        kin, pp = 3 * p * p, p * p
        assert (H * W) % 128 == 0, "H*W must be a multiple of 128"
        mt = self.m_tile if self.m_tile is not None else _pick_m_tile(M)
        assert mt % 128 == 0 and M % mt == 0
        num_tiles = M // mt

        # 1) depth -> normalized disparity in [-1, 1]   (Pallas kernel #1,
        #    gridded over views so VMEM stays bounded and v7x shards it).
        S = (H * W) // 128
        d3 = depths.reshape(N, S, 128).astype(f32)
        disp = pl.pallas_call(
            _depth_norm_kernel,
            out_shape=jax.ShapeDtypeStruct((N, S, 128), f32),
            grid=(N,),
            in_specs=[pl.BlockSpec((1, S, 128), lambda n: (n, 0, 0))],
            out_specs=pl.BlockSpec((1, S, 128), lambda n: (n, 0, 0)),
            compiler_params=pltpu.CompilerParams(
                dimension_semantics=("parallel",)),
        )(d3).reshape(N, 1, H, W)

        # 2) patchify (pure layout permutation, XLA glue).  M is the lane dim.
        #    Image and disparity rows stay SEPARATE inputs (no HBM concat).
        # TODO(synk): the disparity patch rows could be produced directly by
        # kernel #1 to save one small HBM round-trip.
        img_rows = _patchify_T(images.astype(f32), p)          # (kin, M)
        disp_rows = _patchify_T(disp, p)                       # (pp,  M)

        # 3) scheduler scalar k = sqrt(1-acp)/sqrt(acp)  (add_noise + DDIM
        #    pred_original_sample collapse to x0 = lat + k*(noise - eps)).
        acp = self.alphas_cumprod[t]
        k_scalar = (jnp.sqrt(1.0 - acp) *
                    (1.0 / jnp.sqrt(acp))).reshape(1, 1).astype(f32)

        # 4) noise + rays, channel-major (lane-dense M).  Rays are MXU-only
        #    operands -> pre-cast bf16 and padded to a sublane multiple.
        # TODO(synk): noise could be generated in-kernel (pltpu.prng_random_bits)
        # to save 8*M*4 B of HBM reads; kept as a streamed input for simplicity.
        noise = jax.random.normal(self._noise_key, (2 * C, M), f32)
        rays = self.get_rays_embeddings(N, h, w)               # (N, rc, h, w)
        rays = jnp.concatenate(
            [rays, jnp.zeros((N, self.rays_pad - self.rays_channels, h, w), f32)],
            axis=1)
        rays_T = jnp.transpose(rays, (1, 0, 2, 3)).reshape(self.rays_pad, M)
        rays_T = rays_T.astype(bf16)

        # 5) text biases (M-independent) hoisted to XLA; the hybrid-CFG text
        #    guidance collapses into one (2C, 1) bias vector.
        text_gs = 2.0 * self.guidance_scale / 3.0
        bias_c = jnp.mean(text_embeddings.astype(f32), axis=0) @ self.w_txt
        bias_u = jnp.mean(uncond_text_embeddings.astype(f32), axis=0) @ self.w_txt
        bias_comb = ((1.0 + text_gs) * bias_c
                     - text_gs * bias_u).reshape(2 * C, 1).astype(f32)

        # 6) fused kernel over the M grid: encode + collapsed-CFG UNet +
        #    guidance + pred_original_sample + decode + partial SSE losses.
        #    M_TILE sizing: ~1024-2048 on v7x (64 MiB VMEM / 2 TCs), larger on
        #    v5e/v6e if vmem_limit_bytes is raised; demo uses 128.
        dec_rows = self.w_dec.shape[0]
        flops = (2 * M * 2 * C * (kin + pp + 2 * C + self.rays_pad)
                 + 2 * M * dec_rows * 2 * C
                 + 30 * M * 2 * C + 3 * M * dec_rows)
        bytes_accessed = (4 * M * (kin + pp + 2 * C) + 2 * M * self.rays_pad
                          + 2 * (2 * C) * (kin + pp + 2 * C + self.rays_pad)
                          + 2 * dec_rows * 2 * C
                          + 4 * num_tiles * 8 * 128 * 2 + 64)

        kernel = functools.partial(_fused_train_step_kernel,
                                   self.use_depth_loss, C, kin, pp)
        out_spec = pl.BlockSpec((1, 8, 128), lambda i: (i, 0, 0))
        loss_lat_p, loss_img_p = pl.pallas_call(
            kernel,
            out_shape=(jax.ShapeDtypeStruct((num_tiles, 8, 128), f32),
                       jax.ShapeDtypeStruct((num_tiles, 8, 128), f32)),
            grid=(num_tiles,),
            in_specs=[_const_spec(k_scalar), _const_spec(bias_comb),
                      _tile_spec(kin, mt), _tile_spec(pp, mt),
                      _tile_spec(2 * C, mt), _tile_spec(self.rays_pad, mt),
                      _const_spec(self.w_enc_img), _const_spec(self.w_enc_dep),
                      _const_spec(self.w_ul), _const_spec(self.w_ur),
                      _const_spec(self.w_dec)],
            out_specs=(out_spec, out_spec),
            compiler_params=pltpu.CompilerParams(
                dimension_semantics=("parallel",)),
            cost_estimate=pl.CostEstimate(flops=int(flops), transcendentals=0,
                                          bytes_accessed=int(bytes_accessed)),
        )(k_scalar, bias_comb, img_rows, disp_rows, noise, rays_T,
          self.w_enc_img, self.w_enc_dep, self.w_ul, self.w_ur, self.w_dec)

        loss_latent_sds = jnp.sum(loss_lat_p[:, 0, 0])
        loss_img_sds = jnp.sum(loss_img_p[:, 0, 0])
        loss_embedding = jnp.float32(0.0)
        return loss_latent_sds, loss_img_sds, loss_embedding


# ----------------------------------------------------------------------------

if __name__ == "__main__":
    key = jax.random.PRNGKey(0)
    k_img, k_dep, k_txt = jax.random.split(key, 3)

    # num_views=2, rendered image 128x128 -> latents 16x16, M = 512 -> 4 tiles
    # of 128 columns each (exercises the gridded/pipelined path).
    N, H, W = 2, 128, 128
    T_tok, D_txt = 8, 32

    images = jax.random.uniform(k_img, (N, 3, H, W), jnp.float32)
    depths = 1.0 + 4.0 * jax.random.uniform(k_dep, (N, 1, H, W), jnp.float32)
    text_embeddings = jax.random.normal(k_txt, (T_tok, D_txt), jnp.float32)
    uncond_text_embeddings = jnp.zeros((T_tok, D_txt), jnp.float32)
    t = jnp.int32(500)           # timestep index into scheduler tables

    refiner = MultiviewSDSPPRefinerPallas(
        guidance_scale=10.0, guidance_type='hybrid', img_size=H,
        text_dim=D_txt, m_tile=128, seed=0)

    train_step = jax.jit(refiner.train_step)
    loss_latent_sds, loss_img_sds, loss_embedding = train_step(
        images, depths, t, text_embeddings, uncond_text_embeddings)

    jax.block_until_ready((loss_latent_sds, loss_img_sds, loss_embedding))
    assert jnp.isfinite(loss_latent_sds) and jnp.isfinite(loss_img_sds)
    print("KERNEL_OK")
</pallas_src>

<mosaic_0001>
module attributes {stable_mosaic.version = 11 : i64} {
  func.func @_depth_norm_kernel(%arg0: i32, %arg1: memref<1x128x128xf32, #tpu.memory_space<vmem>>, %arg2: memref<1x128x128xf32, #tpu.memory_space<vmem>>) attributes {dimension_semantics = [#tpu.dimension_semantics<parallel>], iteration_bounds = array<i64: 2>, scalar_prefetch = 0 : i64, scratch_operands = 0 : i64, tpu.core_type = #tpu.core_type<tc>, window_params = [{transform_indices = @transform_0, window_bounds = array<i64: 1, 128, 128>}, {transform_indices = @transform_1, window_bounds = array<i64: 1, 128, 128>}]} {
    %c0 = arith.constant 0 : index
    %c0_0 = arith.constant 0 : index
    %c0_1 = arith.constant 0 : index
    %0 = vector.load %arg1[%c0, %c0_0, %c0_1] : memref<1x128x128xf32, #tpu.memory_space<vmem>>, vector<1x128x128xf32>
    %cst = arith.constant 1.000000e+00 : f32
    %1 = vector.broadcast %cst : f32 to vector<1x128x128xf32>
    %2 = arith.divf %1, %0 : vector<1x128x128xf32>
    %cst_2 = arith.constant dense<0x7F800000> : vector<1x128xf32>
    %3 = vector.multi_reduction <minimumf>, %2, %cst_2 [2] : vector<1x128x128xf32> to vector<1x128xf32>
    %4 = vector.shape_cast %3 : vector<1x128xf32> to vector<1x128x1xf32>
    %cst_3 = arith.constant dense<0x7F800000> : vector<1x1xf32>
    %5 = vector.multi_reduction <minimumf>, %4, %cst_3 [1] : vector<1x128x1xf32> to vector<1x1xf32>
    %6 = vector.shape_cast %5 : vector<1x1xf32> to vector<1x1x1xf32>
    %cst_4 = arith.constant dense<0xFF800000> : vector<1x128xf32>
    %7 = vector.multi_reduction <maximumf>, %2, %cst_4 [2] : vector<1x128x128xf32> to vector<1x128xf32>
    %8 = vector.shape_cast %7 : vector<1x128xf32> to vector<1x128x1xf32>
    %cst_5 = arith.constant dense<0xFF800000> : vector<1x1xf32>
    %9 = vector.multi_reduction <maximumf>, %8, %cst_5 [1] : vector<1x128x1xf32> to vector<1x1xf32>
    %10 = vector.shape_cast %9 : vector<1x1xf32> to vector<1x1x1xf32>
    %11 = arith.subf %10, %6 : vector<1x1x1xf32>
    %cst_6 = arith.constant 9.99999968E-21 : f32
    %12 = vector.broadcast %cst_6 : f32 to vector<1x1x1xf32>
    %13 = arith.maximumf %11, %12 : vector<1x1x1xf32>
    %14 = tpu.reciprocal %13 : vector<1x1x1xf32> -> vector<1x1x1xf32>
    %cst_7 = arith.constant 2.000000e+00 : f32
    %15 = vector.broadcast %cst_7 : f32 to vector<1x1x1xf32>
    %16 = arith.mulf %15, %14 : vector<1x1x1xf32>
    %17 = vector.broadcast %6 : vector<1x1x1xf32> to vector<1x128x128xf32>
    %18 = arith.subf %2, %17 : vector<1x128x128xf32>
    %19 = vector.broadcast %16 : vector<1x1x1xf32> to vector<1x128x128xf32>
    %20 = arith.mulf %18, %19 : vector<1x128x128xf32>
    %cst_8 = arith.constant 1.000000e+00 : f32
    %21 = vector.broadcast %cst_8 : f32 to vector<1x128x128xf32>
    %22 = arith.subf %20, %21 : vector<1x128x128xf32>
    %c0_9 = arith.constant 0 : index
    %c0_10 = arith.constant 0 : index
    %c0_11 = arith.constant 0 : index
    %23 = vector.load %arg2[%c0_9, %c0_10, %c0_11] : memref<1x128x128xf32, #tpu.memory_space<vmem>>, vector<1x128x128xf32>
    tpu.vector_store %arg2[%c0_9, %c0_10, %c0_11], %22 {strides = array<i32>} : memref<1x128x128xf32, #tpu.memory_space<vmem>>, vector<1x128x128xf32>,
    return
  }
  func.func @transform_0(%arg0: i32) -> (i32, i32, i32) {
    %c0_i32 = arith.constant 0 : i32
    %c0_i32_0 = arith.constant 0 : i32
    %c0_i32_1 = arith.constant 0 : i32
    return %arg0, %c0_i32, %c0_i32_0 : i32, i32, i32
  }
  func.func @transform_1(%arg0: i32) -> (i32, i32, i32) {
    %c0_i32 = arith.constant 0 : i32
    %c0_i32_0 = arith.constant 0 : i32
    %c0_i32_1 = arith.constant 0 : i32
    return %arg0, %c0_i32, %c0_i32_0 : i32, i32, i32
  }
}

module attributes {stable_mosaic.version = 11 : i64} {
  func.func @_fused_train_step_kernel(%arg0: i32, %arg1: memref<1x1xf32, #tpu.memory_space<vmem>>, %arg2: memref<8x1xf32, #tpu.memory_space<vmem>>, %arg3: memref<192x128xf32, #tpu.memory_space<vmem>>, %arg4: memref<64x128xf32, #tpu.memory_space<vmem>>, %arg5: memref<8x128xf32, #tpu.memory_space<vmem>>, %arg6: memref<8x128xbf16, #tpu.memory_space<vmem>>, %arg7: memref<8x192xbf16, #tpu.memory_space<vmem>>, %arg8: memref<8x64xbf16, #tpu.memory_space<vmem>>, %arg9: memref<8x8xbf16, #tpu.memory_space<vmem>>, %arg10: memref<8x8xbf16, #tpu.memory_space<vmem>>, %arg11: memref<192x8xbf16, #tpu.memory_space<vmem>>, %arg12: memref<1x8x128xf32, #tpu.memory_space<vmem>>, %arg13: memref<1x8x128xf32, #tpu.memory_space<vmem>>) attributes {dimension_semantics = [#tpu.dimension_semantics<parallel>], iteration_bounds = array<i64: 4>, scalar_prefetch = 0 : i64, scratch_operands = 0 : i64, tpu.core_type = #tpu.core_type<tc>, window_params = [{pipeline_mode = #tpu.pipeline_mode<synchronous>, transform_indices = @transform_0, window_bounds = array<i64: 1, 1>}, {pipeline_mode = #tpu.pipeline_mode<synchronous>, transform_indices = @transform_1, window_bounds = array<i64: 8, 1>}, {transform_indices = @transform_2, window_bounds = array<i64: 192, 128>}, {transform_indices = @transform_3, window_bounds = array<i64: 64, 128>}, {transform_indices = @transform_4, window_bounds = array<i64: 8, 128>}, {transform_indices = @transform_5, window_bounds = array<i64: 8, 128>}, {pipeline_mode = #tpu.pipeline_mode<synchronous>, transform_indices = @transform_6, window_bounds = array<i64: 8, 192>}, {pipeline_mode = #tpu.pipeline_mode<synchronous>, transform_indices = @transform_7, window_bounds = array<i64: 8, 64>}, {pipeline_mode = #tpu.pipeline_mode<synchronous>, transform_indices = @transform_8, window_bounds = array<i64: 8, 8>}, {pipeline_mode = #tpu.pipeline_mode<synchronous>, transform_indices = @transform_9, window_bounds = array<i64: 8, 8>}, {pipeline_mode = #tpu.pipeline_mode<synchronous>, transform_indices = @transform_10, window_bounds = array<i64: 192, 8>}, {transform_indices = @transform_11, window_bounds = array<i64: 1, 8, 128>}, {transform_indices = @transform_12, window_bounds = array<i64: 1, 8, 128>}]} {
    %c0 = arith.constant 0 : index
    %c0_0 = arith.constant 0 : index
    %0 = vector.load %arg3[%c0, %c0_0] : memref<192x128xf32, #tpu.memory_space<vmem>>, vector<192x128xf32>
    %c0_1 = arith.constant 0 : index
    %c0_2 = arith.constant 0 : index
    %1 = vector.load %arg4[%c0_1, %c0_2] : memref<64x128xf32, #tpu.memory_space<vmem>>, vector<64x128xf32>
    %c0_3 = arith.constant 0 : index
    %c0_4 = arith.constant 0 : index
    %2 = vector.load %arg7[%c0_3, %c0_4] : memref<8x192xbf16, #tpu.memory_space<vmem>>, vector<8x192xbf16>
    %3 = arith.truncf %0 : vector<192x128xf32> to vector<192x128xbf16>
    %cst = arith.constant dense<0.000000e+00> : vector<8x128xf32>
    %4 = tpu.matmul %2, %3, %cst {dimension_numbers = #tpu.dot_dimension_numbers<[1], [0], [0], [1], [0, 0, 1, 1], [], []>} : vector<8x192xbf16>, vector<192x128xbf16>, vector<8x128xf32> -> vector<8x128xf32>
    %c0_5 = arith.constant 0 : index
    %c0_6 = arith.constant 0 : index
    %5 = vector.load %arg8[%c0_5, %c0_6] : memref<8x64xbf16, #tpu.memory_space<vmem>>, vector<8x64xbf16>
    %6 = arith.truncf %1 : vector<64x128xf32> to vector<64x128xbf16>
    %cst_7 = arith.constant dense<0.000000e+00> : vector<8x128xf32>
    %7 = tpu.matmul %5, %6, %cst_7 {dimension_numbers = #tpu.dot_dimension_numbers<[1], [0], [0], [1], [0, 0, 1, 1], [], []>} : vector<8x64xbf16>, vector<64x128xbf16>, vector<8x128xf32> -> vector<8x128xf32>
    %8 = arith.addf %4, %7 : vector<8x128xf32>
    %c0_8 = arith.constant 0 : index
    %c0_9 = arith.constant 0 : index
    %9 = vector.load %arg9[%c0_8, %c0_9] : memref<8x8xbf16, #tpu.memory_space<vmem>>, vector<8x8xbf16>
    %10 = arith.truncf %8 : vector<8x128xf32> to vector<8x128xbf16>
    %cst_10 = arith.constant dense<0.000000e+00> : vector<8x128xf32>
    %11 = tpu.matmul %9, %10, %cst_10 {dimension_numbers = #tpu.dot_dimension_numbers<[1], [0], [0], [1], [0, 0, 1, 1], [], []>} : vector<8x8xbf16>, vector<8x128xbf16>, vector<8x128xf32> -> vector<8x128xf32>
    %c0_11 = arith.constant 0 : index
    %c0_12 = arith.constant 0 : index
    %12 = vector.load %arg10[%c0_11, %c0_12] : memref<8x8xbf16, #tpu.memory_space<vmem>>, vector<8x8xbf16>
    %c0_13 = arith.constant 0 : index
    %c0_14 = arith.constant 0 : index
    %13 = vector.load %arg6[%c0_13, %c0_14] : memref<8x128xbf16, #tpu.memory_space<vmem>>, vector<8x128xbf16>
    %cst_15 = arith.constant dense<0.000000e+00> : vector<8x128xf32>
    %14 = tpu.matmul %12, %13, %cst_15 {dimension_numbers = #tpu.dot_dimension_numbers<[1], [0], [0], [1], [0, 0, 1, 1], [], []>} : vector<8x8xbf16>, vector<8x128xbf16>, vector<8x128xf32> -> vector<8x128xf32>
    %15 = arith.addf %11, %14 : vector<8x128xf32>
    %c0_16 = arith.constant 0 : index
    %c0_17 = arith.constant 0 : index
    %16 = vector.load %arg2[%c0_16, %c0_17] : memref<8x1xf32, #tpu.memory_space<vmem>>, vector<8x1xf32>
    %17 = vector.broadcast %16 : vector<8x1xf32> to vector<8x128xf32>
    %18 = arith.addf %15, %17 : vector<8x128xf32>
    %c0_18 = arith.constant 0 : index
    %c0_19 = arith.constant 0 : index
    %19 = vector.load %arg1[%c0_18, %c0_19] : memref<1x1xf32, #tpu.memory_space<vmem>>, vector<1x1xf32>
    %c0_20 = arith.constant 0 : index
    %c0_21 = arith.constant 0 : index
    %20 = vector.load %arg5[%c0_20, %c0_21] : memref<8x128xf32, #tpu.memory_space<vmem>>, vector<8x128xf32>
    %21 = arith.subf %20, %18 : vector<8x128xf32>
    %22 = vector.broadcast %19 : vector<1x1xf32> to vector<8x128xf32>
    %23 = arith.mulf %22, %21 : vector<8x128xf32>
    %24 = arith.addf %8, %23 : vector<8x128xf32>
    %c0_22 = arith.constant 0 : index
    %c0_23 = arith.constant 0 : index
    %25 = vector.load %arg11[%c0_22, %c0_23] : memref<192x8xbf16, #tpu.memory_space<vmem>>, vector<192x8xbf16>
    %26 = arith.truncf %24 : vector<8x128xf32> to vector<8x128xbf16>
    %cst_24 = arith.constant dense<0.000000e+00> : vector<192x128xf32>
    %27 = tpu.matmul %25, %26, %cst_24 {dimension_numbers = #tpu.dot_dimension_numbers<[1], [0], [0], [1], [0, 0, 1, 1], [], []>} : vector<192x8xbf16>, vector<8x128xbf16>, vector<192x128xf32> -> vector<192x128xf32>
    %28 = tpu.iota {dimensions = array<i32: 0>} : vector<8x128xi32>
    %c4_i32 = arith.constant 4 : i32
    %29 = vector.broadcast %c4_i32 : i32 to vector<8x128xi32>
    %30 = arith.cmpi slt, %28, %29 : vector<8x128xi32>
    %31 = arith.mulf %23, %23 : vector<8x128xf32>
    %cst_25 = arith.constant 0.000000e+00 : f32
    %32 = vector.broadcast %cst_25 : f32 to vector<8x128xf32>
    %33 = arith.select %30, %31, %32 : vector<8x128xi1>, vector<8x128xf32>
    %34 = vector.shape_cast %33 : vector<8x128xf32> to vector<1x8x128xf32>
    %cst_26 = arith.constant dense<0.000000e+00> : vector<1xf32>
    %35 = vector.multi_reduction <add>, %34, %cst_26 [1, 2] : vector<1x8x128xf32> to vector<1xf32>
    %36 = vector.shape_cast %35 : vector<1xf32> to vector<1x1x1xf32>
    %37 = vector.extract %36[0, 0, 0] : f32 from vector<1x1x1xf32>
    %38 = arith.subf %27, %0 : vector<192x128xf32>
    %39 = arith.mulf %38, %38 : vector<192x128xf32>
    %40 = vector.shape_cast %39 : vector<192x128xf32> to vector<1x192x128xf32>
    %cst_27 = arith.constant dense<0.000000e+00> : vector<1xf32>
    %41 = vector.multi_reduction <add>, %40, %cst_27 [1, 2] : vector<1x192x128xf32> to vector<1xf32>
    %42 = vector.shape_cast %41 : vector<1xf32> to vector<1x1x1xf32>
    %43 = vector.extract %42[0, 0, 0] : f32 from vector<1x1x1xf32>
    %44 = vector.broadcast %37 : f32 to vector<1x8x128xf32>
    %c0_28 = arith.constant 0 : index
    %c0_29 = arith.constant 0 : index
    %c0_30 = arith.constant 0 : index
    %45 = vector.load %arg12[%c0_28, %c0_29, %c0_30] : memref<1x8x128xf32, #tpu.memory_space<vmem>>, vector<1x8x128xf32>
    tpu.vector_store %arg12[%c0_28, %c0_29, %c0_30], %44 {strides = array<i32>} : memref<1x8x128xf32, #tpu.memory_space<vmem>>, vector<1x8x128xf32>,
    %46 = vector.broadcast %43 : f32 to vector<1x8x128xf32>
    %c0_31 = arith.constant 0 : index
    %c0_32 = arith.constant 0 : index
    %c0_33 = arith.constant 0 : index
    %47 = vector.load %arg13[%c0_31, %c0_32, %c0_33] : memref<1x8x128xf32, #tpu.memory_space<vmem>>, vector<1x8x128xf32>
    tpu.vector_store %arg13[%c0_31, %c0_32, %c0_33], %46 {strides = array<i32>} : memref<1x8x128xf32, #tpu.memory_space<vmem>>, vector<1x8x128xf32>,
    return
  }
  func.func @transform_0(%arg0: i32) -> (i32, i32) {
    %c0_i32 = arith.constant 0 : i32
    %c0_i32_0 = arith.constant 0 : i32
    %c0_i32_1 = arith.constant 0 : i32
    return %c0_i32, %c0_i32_0 : i32, i32
  }
  func.func @transform_1(%arg0: i32) -> (i32, i32) {
    %c0_i32 = arith.constant 0 : i32
    %c0_i32_0 = arith.constant 0 : i32
    %c0_i32_1 = arith.constant 0 : i32
    return %c0_i32, %c0_i32_0 : i32, i32
  }
  func.func @transform_2(%arg0: i32) -> (i32, i32) {
    %c0_i32 = arith.constant 0 : i32
    %c0_i32_0 = arith.constant 0 : i32
    return %c0_i32, %arg0 : i32, i32
  }
  func.func @transform_3(%arg0: i32) -> (i32, i32) {
    %c0_i32 = arith.constant 0 : i32
    %c0_i32_0 = arith.constant 0 : i32
    return %c0_i32, %arg0 : i32, i32
  }
  func.func @transform_4(%arg0: i32) -> (i32, i32) {
    %c0_i32 = arith.constant 0 : i32
    %c0_i32_0 = arith.constant 0 : i32
    return %c0_i32, %arg0 : i32, i32
  }
  func.func @transform_5(%arg0: i32) -> (i32, i32) {
    %c0_i32 = arith.constant 0 : i32
    %c0_i32_0 = arith.constant 0 : i32
    return %c0_i32, %arg0 : i32, i32
  }
  func.func @transform_6(%arg0: i32) -> (i32, i32) {
    %c0_i32 = arith.constant 0 : i32
    %c0_i32_0 = arith.constant 0 : i32
    %c0_i32_1 = arith.constant 0 : i32
    return %c0_i32, %c0_i32_0 : i32, i32
  }
  func.func @transform_7(%arg0: i32) -> (i32, i32) {
    %c0_i32 = arith.constant 0 : i32
    %c0_i32_0 = arith.constant 0 : i32
    %c0_i32_1 = arith.constant 0 : i32
    return %c0_i32, %c0_i32_0 : i32, i32
  }
  func.func @transform_8(%arg0: i32) -> (i32, i32) {
    %c0_i32 = arith.constant 0 : i32
    %c0_i32_0 = arith.constant 0 : i32
    %c0_i32_1 = arith.constant 0 : i32
    return %c0_i32, %c0_i32_0 : i32, i32
  }
  func.func @transform_9(%arg0: i32) -> (i32, i32) {
    %c0_i32 = arith.constant 0 : i32
    %c0_i32_0 = arith.constant 0 : i32
    %c0_i32_1 = arith.constant 0 : i32
    return %c0_i32, %c0_i32_0 : i32, i32
  }
  func.func @transform_10(%arg0: i32) -> (i32, i32) {
    %c0_i32 = arith.constant 0 : i32
    %c0_i32_0 = arith.constant 0 : i32
    %c0_i32_1 = arith.constant 0 : i32
    return %c0_i32, %c0_i32_0 : i32, i32
  }
  func.func @transform_11(%arg0: i32) -> (i32, i32, i32) {
    %c0_i32 = arith.constant 0 : i32
    %c0_i32_0 = arith.constant 0 : i32
    %c0_i32_1 = arith.constant 0 : i32
    return %arg0, %c0_i32, %c0_i32_0 : i32, i32, i32
  }
  func.func @transform_12(%arg0: i32) -> (i32, i32, i32) {
    %c0_i32 = arith.constant 0 : i32
    %c0_i32_0 = arith.constant 0 : i32
    %c0_i32_1 = arith.constant 0 : i32
    return %arg0, %c0_i32, %c0_i32_0 : i32, i32, i32
  }
}

</mosaic_0001>

<llo_original>
// kernel: train_step.2
$region0: #{train_step.2}
  #allocation0 [shape = 'u32[]', space=smem, size = 0x4, offset = 0x4, fixed_abs, tag = 'smem constant byte address 0x4 - core index']
  #allocation1 [shape = 'u32[144,128]{1,0:T(1,128)}', space=vmem, size = 0x12000, scoped, tag = 'internal scratch']
  %s0 = inlined_call_operand.vmem [shape: f32[2,128,128], index: 0, kind: input, shape index: {}]
  %s1 = inlined_call_operand.vmem [shape: f32[2,128,128], index: 1, kind: output, shape index: {}]
  %s2 = sld [smem:[#allocation0]]
  $region37: #{train_step.2} parent=0
    _
  %s4 = ssub.s32 1, %s2
  %s5 = scalar_select 0, %s4, %s2
  loop: start=0, step=1, limit=4
  $region2: #{train_step.2} parent=0 // loop_pre_header
    _
  $region3: #{train_step.2} parent=0 // loop_header
    %s7 = sphi 0, %s11
    %p8 = scmp.ge.s32.totalorder %s7, 4
    %s17 = sphi 0, %s19
    %s20 = sphi 0, %s17
    %s21 = sphi 0, %s20
    %s37 = sphi 0, %s21
    %s43 = sphi 0, %s45
    %s46 = sphi 0, %s43
    %s47 = sphi 0, %s46
    %s63 = sphi 0, %s47
  $region4: #{train_step.2} parent=0 // loop_header_branch
    %10 = sbr.rel (%p8) target = $region8
  $region5: #{train_step.2} parent=0 // loop_body
    %s12 = ssub.s32 %s7, 1
    %s13 = ssub.s32 %s7, 2
    %s14 = sadd.s32 %s7, 1
    %s15 = ssub.s32 %s7, %s14
    %p16 = scmp.eq.s32.totalorder %s15, 0
    %s18 = sadd.s32 %s17, 1
    %s19 = scalar_select %p16, %s17, %s18
    %p22 = pneg %p16
    %p23 = scmp.eq.s32.totalorder %s7, 1
    %p24 = por %p22, %p23
    %p25 = scmp.ne.s32.totalorder %s17, %s20
    %p26 = scmp.eq.s32.totalorder %s7, 0
    %p27 = por %p25, %p26
    %p28 = scmp.ne.s32.totalorder %s17, %s20
    %p29 = scmp.eq.s32.totalorder %s12, 1
    %p30 = por %p28, %p29
    %p31 = scmp.ne.s32.totalorder %s20, %s21
    %p32 = scmp.eq.s32.totalorder %s12, 0
    %p33 = por %p31, %p32
    %p34 = scmp.ne.s32.totalorder %s20, %s21
    %p35 = scmp.eq.s32.totalorder %s13, 1
    %p36 = por %p34, %p35
    %p38 = scmp.ne.s32.totalorder %s21, %s37
    %p39 = scmp.eq.s32.totalorder %s13, 0
    %p40 = por %p38, %p39
    %s41 = ssub.s32 %s7, %s14
    %p42 = scmp.eq.s32.totalorder %s41, 0
    %s44 = sadd.s32 %s43, 1
    %s45 = scalar_select %p42, %s43, %s44
    %p48 = pneg %p42
    %p49 = scmp.eq.s32.totalorder %s7, 1
    %p50 = por %p48, %p49
    %p51 = scmp.ne.s32.totalorder %s43, %s46
    %p52 = scmp.eq.s32.totalorder %s7, 0
    %p53 = por %p51, %p52
    %p54 = scmp.ne.s32.totalorder %s43, %s46
    %p55 = scmp.eq.s32.totalorder %s12, 1
    %p56 = por %p54, %p55
    %p57 = scmp.ne.s32.totalorder %s46, %s47
    %p58 = scmp.eq.s32.totalorder %s12, 0
    %p59 = por %p57, %p58
    %p60 = scmp.ne.s32.totalorder %s46, %s47
    %p61 = scmp.eq.s32.totalorder %s13, 1
    %p62 = por %p60, %p61
    %p64 = scmp.ne.s32.totalorder %s47, %s63
    %p65 = scmp.eq.s32.totalorder %s13, 0
    %p66 = por %p64, %p65
    %p67 = scmp.le.s32.totalorder 1, %s7
    %p68 = scmp.lt.s32.totalorder %s7, 3
    %p69 = pnand %p67, %p68
    %p70 = pneg %p69
    // Predicated region
    $region9: #{train_step.2} parent=5 // pred_check
      _
    $region10: #{train_step.2} parent=5 // pred_check_branch
      %72 = sbr.rel (%p69) target = $region12
    $region11: #{train_step.2} parent=5 // pred_region
      %s73 = ssub.s32 %s7, 1
    $region12: #{train_step.2} parent=5 // pred_fallthru
      _
    %p74 = scmp.lt.s32.totalorder %s7, 2
    // Predicated region
    $region13: #{train_step.2} parent=5 // pred_check
      %p75 = pneg %p74
    $region14: #{train_step.2} parent=5 // pred_check_branch
      %77 = sbr.rel (%p75) target = $region16
    $region15: #{train_step.2} parent=5 // pred_region
      // Predicated region
      $region17: #{train_step.2} parent=15 // pred_check
        %p78 = pneg %p27
      $region18: #{train_step.2} parent=15 // pred_check_branch
        %80 = sbr.rel (%p78) target = $region20
      $region19: #{train_step.2} parent=15 // pred_region
        %p81 = scmp.lt.s32.totalorder %s7, 1
        %s82 = scalar_select %p81, %s7, 1
        %s83 = smul.addr %s82, 16
        %s84 = smul.addr %s83, 8
        %s85 = scalar_lea.vmem %s0, %s84
      $region20: #{train_step.2} parent=15 // pred_fallthru
        _
    $region16: #{train_step.2} parent=5 // pred_fallthru
      _
    %p86 = scmp.le.s32.totalorder 1, %s7
    %p87 = scmp.lt.s32.totalorder %s7, 3
    %p88 = pnand %p86, %p87
    %p89 = pneg %p88
    // Predicated region
    $region21: #{train_step.2} parent=5 // pred_check
      _
    $region22: #{train_step.2} parent=5 // pred_check_branch
      %91 = sbr.rel (%p88) target = $region24
    $region23: #{train_step.2} parent=5 // pred_region
      %s92 = ssub.s32 %s7, 1
      %p93 = scmp.lt.s32.totalorder %s12, 1
      %s94 = scalar_select %p93, %s12, 1
      %s95 = smul.addr %s94, 16
      %s96 = smul.addr %s95, 8
      %s97 = scalar_lea.vmem %s0, %s96
      %p98 = pneg %p33
      %p99 = pneg %p30
      %p100 = pneg %p59
      %p101 = pneg %p56
      %p102 = scmp.lt.s32.totalorder %s12, 1
      %s103 = scalar_select %p102, %s12, 1
      %s104 = smul.addr %s103, 16
      %s105 = smul.addr %s104, 8
      %s106 = scalar_lea.vmem %s1, %s105
      %p107 = scmp.lt.s32.totalorder %s12, 1
      %s108 = scalar_select %p107, %s12, 1
      %s109 = smul.addr %s108, 16
      %s110 = smul.addr %s109, 8
      %s111 = scalar_lea.vmem %s0, %s110
      %p112 = scmp.lt.s32.totalorder %s12, 1
      %s113 = scalar_select %p112, %s12, 1
      %s114 = smul.addr %s113, 16
      %s115 = smul.addr %s114, 8
      %s116 = scalar_lea.vmem %s1, %s115
      %v117 = vld [vmem:[%s111] sm:$0xff]
      %v118 = vld [vmem:[%s111 + $0x8] sm:$0xff]
      %v119 = vld [vmem:[%s111 + $0x10] sm:$0xff]
      %v120 = vld [vmem:[%s111 + $0x18] sm:$0xff]
      %v121 = vld [vmem:[%s111 + $0x20] sm:$0xff]
      %v122 = vld [vmem:[%s111 + $0x28] sm:$0xff]
      %v123 = vld [vmem:[%s111 + $0x30] sm:$0xff]
      %v124 = vld [vmem:[%s111 + $0x38] sm:$0xff]
      %v125 = vld [vmem:[%s111 + $0x40] sm:$0xff]
      %v126 = vld [vmem:[%s111 + $0x48] sm:$0xff]
      %v127 = vld [vmem:[%s111 + $0x50] sm:$0xff]
      %v128 = vld [vmem:[%s111 + $0x58] sm:$0xff]
      %v129 = vld [vmem:[%s111 + $0x60] sm:$0xff]
      %v130 = vld [vmem:[%s111 + $0x68] sm:$0xff]
      %v131 = vld [vmem:[%s111 + $0x70] sm:$0xff]
      %v132 = vld [vmem:[%s111 + $0x78] sm:$0xff]
      %v133 = vrcp.pop %v117
      %v134 = vmul.f32 1.0, %v133
      %v135 = vrcp.pop %v118
      %v136 = vmul.f32 1.0, %v135
      %v137 = vrcp.pop %v119
      %v138 = vmul.f32 1.0, %v137
      %v139 = vrcp.pop %v120
      %v140 = vmul.f32 1.0, %v139
      %v141 = vrcp.pop %v121
      %v142 = vmul.f32 1.0, %v141
      %v143 = vrcp.pop %v122
      %v144 = vmul.f32 1.0, %v143
      %v145 = vrcp.pop %v123
      %v146 = vmul.f32 1.0, %v145
      %v147 = vrcp.pop %v124
      %v148 = vmul.f32 1.0, %v147
      %v149 = vrcp.pop %v125
      %v150 = vmul.f32 1.0, %v149
      %v151 = vrcp.pop %v126
      %v152 = vmul.f32 1.0, %v151
      %v153 = vrcp.pop %v127
      %v154 = vmul.f32 1.0, %v153
      %v155 = vrcp.pop %v128
      %v156 = vmul.f32 1.0, %v155
      %v157 = vrcp.pop %v129
      %v158 = vmul.f32 1.0, %v157
      %v159 = vrcp.pop %v130
      %v160 = vmul.f32 1.0, %v159
      %v161 = vrcp.pop %v131
      %v162 = vmul.f32 1.0, %v161
      %v163 = vrcp.pop %v132
      %v164 = vmul.f32 1.0, %v163
      %165 = vmin.xlane.f32.xlu0 %v134
      %v166 = vpop.xlane.xlu0 %165
      %167 = vmin.xlane.f32.xlu0 %v136
      %v168 = vpop.xlane.xlu0 %167
      %169 = vmin.xlane.f32.xlu0 %v138
      %v170 = vpop.xlane.xlu0 %169
      %171 = vmin.xlane.f32.xlu0 %v140
      %v172 = vpop.xlane.xlu0 %171
      %173 = vmin.xlane.f32.xlu0 %v142
      %v174 = vpop.xlane.xlu0 %173
      %175 = vmin.xlane.f32.xlu0 %v144
      %v176 = vpop.xlane.xlu0 %175
      %177 = vmin.xlane.f32.xlu0 %v146
      %v178 = vpop.xlane.xlu0 %177
      %179 = vmin.xlane.f32.xlu0 %v148
      %v180 = vpop.xlane.xlu0 %179
      %181 = vmin.xlane.f32.xlu0 %v150
      %v182 = vpop.xlane.xlu0 %181
      %183 = vmin.xlane.f32.xlu0 %v152
      %v184 = vpop.xlane.xlu0 %183
      %185 = vmin.xlane.f32.xlu0 %v154
      %v186 = vpop.xlane.xlu0 %185
      %187 = vmin.xlane.f32.xlu0 %v156
      %v188 = vpop.xlane.xlu0 %187
      %189 = vmin.xlane.f32.xlu0 %v158
      %v190 = vpop.xlane.xlu0 %189
      %191 = vmin.xlane.f32.xlu0 %v160
      %v192 = vpop.xlane.xlu0 %191
      %193 = vmin.xlane.f32.xlu0 %v162
      %v194 = vpop.xlane.xlu0 %193
      %195 = vmin.xlane.f32.xlu0 %v164
      %v196 = vpop.xlane.xlu0 %195
      %v197 = vmin.f32 %v166, %v174
      %v198 = vmin.f32 %v168, %v176
      %v199 = vmin.f32 %v170, %v178
      %v200 = vmin.f32 %v172, %v180
      %v201 = vmin.f32 %v197, %v182
      %v202 = vmin.f32 %v198, %v184
      %v203 = vmin.f32 %v199, %v186
      %v204 = vmin.f32 %v200, %v188
      %v205 = vmin.f32 %v201, %v190
      %v206 = vmin.f32 %v202, %v192
      %v207 = vmin.f32 %v203, %v194
      %v208 = vmin.f32 %v204, %v196
      %v209 = vmin.f32 %v205, %v206
      %v210 = vmin.f32 %v207, %v208
      %v211 = vmin.f32 %v209, %v210
      %v212 = vrot.slane %v211, 4
      %v213 = vmin.f32 %v211, %v212
      %v214 = vrot.slane %v213, 2
      %v215 = vmin.f32 %v213, %v214
      %v216 = vrot.slane %v215, 1
      %v217 = vmin.f32 %v215, %v216
      %218 = vmax.xlane.f32.xlu0 %v134
      %v219 = vpop.xlane.xlu0 %218
      %220 = vmax.xlane.f32.xlu0 %v136
      %v221 = vpop.xlane.xlu0 %220
      %222 = vmax.xlane.f32.xlu0 %v138
      %v223 = vpop.xlane.xlu0 %222
      %224 = vmax.xlane.f32.xlu0 %v140
      %v225 = vpop.xlane.xlu0 %224
      %226 = vmax.xlane.f32.xlu0 %v142
      %v227 = vpop.xlane.xlu0 %226
      %228 = vmax.xlane.f32.xlu0 %v144
      %v229 = vpop.xlane.xlu0 %228
      %230 = vmax.xlane.f32.xlu0 %v146
      %v231 = vpop.xlane.xlu0 %230
      %232 = vmax.xlane.f32.xlu0 %v148
      %v233 = vpop.xlane.xlu0 %232
      %234 = vmax.xlane.f32.xlu0 %v150
      %v235 = vpop.xlane.xlu0 %234
      %236 = vmax.xlane.f32.xlu0 %v152
      %v237 = vpop.xlane.xlu0 %236
      %238 = vmax.xlane.f32.xlu0 %v154
      %v239 = vpop.xlane.xlu0 %238
      %240 = vmax.xlane.f32.xlu0 %v156
      %v241 = vpop.xlane.xlu0 %240
      %242 = vmax.xlane.f32.xlu0 %v158
      %v243 = vpop.xlane.xlu0 %242
      %244 = vmax.xlane.f32.xlu0 %v160
      %v245 = vpop.xlane.xlu0 %244
      %246 = vmax.xlane.f32.xlu0 %v162
      %v247 = vpop.xlane.xlu0 %246
      %248 = vmax.xlane.f32.xlu0 %v164
      %v249 = vpop.xlane.xlu0 %248
      %v250 = vmax.f32 %v219, %v227
      %v251 = vmax.f32 %v221, %v229
      %v252 = vmax.f32 %v223, %v231
      %v253 = vmax.f32 %v225, %v233
      %v254 = vmax.f32 %v250, %v235
      %v255 = vmax.f32 %v251, %v237
      %v256 = vmax.f32 %v252, %v239
      %v257 = vmax.f32 %v253, %v241
      %v258 = vmax.f32 %v254, %v243
      %v259 = vmax.f32 %v255, %v245
      %v260 = vmax.f32 %v256, %v247
      %v261 = vmax.f32 %v257, %v249
      %v262 = vmax.f32 %v258, %v259
      %v263 = vmax.f32 %v260, %v261
      %v264 = vmax.f32 %v262, %v263
      %v265 = vrot.slane %v264, 4
      %v266 = vmax.f32 %v264, %v265
      %v267 = vrot.slane %v266, 2
      %v268 = vmax.f32 %v266, %v267
      %v269 = vrot.slane %v268, 1
      %v270 = vmax.f32 %v268, %v269
      %v271 = vsub.f32 %v270, %v217
      %v272 = vmax.f32 %v271, 1e-20
      %v273 = vrcp.pop %v272
      %v274 = vmul.f32 %v273, 2.0
      %v275 = vsub.f32 %v134, %v217
      %v276 = vsub.f32 %v136, %v217
      %v277 = vsub.f32 %v138, %v217
      %v278 = vsub.f32 %v140, %v217
      %v279 = vsub.f32 %v142, %v217
      %v280 = vsub.f32 %v144, %v217
      %v281 = vsub.f32 %v146, %v217
      %v282 = vsub.f32 %v148, %v217
      %v283 = vsub.f32 %v150, %v217
      %v284 = vsub.f32 %v152, %v217
      %v285 = vsub.f32 %v154, %v217
      %v286 = vsub.f32 %v156, %v217
      %v287 = vsub.f32 %v158, %v217
      %v288 = vsub.f32 %v160, %v217
      %v289 = vsub.f32 %v162, %v217
      %v290 = vsub.f32 %v164, %v217
      %v291 = vmul.f32 %v275, %v274
      %v292 = vmul.f32 %v276, %v274
      %v293 = vmul.f32 %v277, %v274
      %v294 = vmul.f32 %v278, %v274
      %v295 = vmul.f32 %v279, %v274
      %v296 = vmul.f32 %v280, %v274
      %v297 = vmul.f32 %v281, %v274
      %v298 = vmul.f32 %v282, %v274
      %v299 = vmul.f32 %v283, %v274
      %v300 = vmul.f32 %v284, %v274
      %v301 = vmul.f32 %v285, %v274
      %v302 = vmul.f32 %v286, %v274
      %v303 = vmul.f32 %v287, %v274
      %v304 = vmul.f32 %v288, %v274
      %v305 = vmul.f32 %v289, %v274
      %v306 = vmul.f32 %v290, %v274
      %v307 = vsub.f32 %v291, 1.0
      %v308 = vsub.f32 %v292, 1.0
      %v309 = vsub.f32 %v293, 1.0
      %v310 = vsub.f32 %v294, 1.0
      %v311 = vsub.f32 %v295, 1.0
      %v312 = vsub.f32 %v296, 1.0
      %v313 = vsub.f32 %v297, 1.0
      %v314 = vsub.f32 %v298, 1.0
      %v315 = vsub.f32 %v299, 1.0
      %v316 = vsub.f32 %v300, 1.0
      %v317 = vsub.f32 %v301, 1.0
      %v318 = vsub.f32 %v302, 1.0
      %v319 = vsub.f32 %v303, 1.0
      %v320 = vsub.f32 %v304, 1.0
      %v321 = vsub.f32 %v305, 1.0
      %v322 = vsub.f32 %v306, 1.0
      %323 = vst [vmem:[%s116] sm:$0xff] %v307
      %324 = vst [vmem:[%s116 + $0x8] sm:$0xff] %v308
      %325 = vst [vmem:[%s116 + $0x10] sm:$0xff] %v309
      %326 = vst [vmem:[%s116 + $0x18] sm:$0xff] %v310
      %327 = vst [vmem:[%s116 + $0x20] sm:$0xff] %v311
      %328 = vst [vmem:[%s116 + $0x28] sm:$0xff] %v312
      %329 = vst [vmem:[%s116 + $0x30] sm:$0xff] %v313
      %330 = vst [vmem:[%s116 + $0x38] sm:$0xff] %v314
      %331 = vst [vmem:[%s116 + $0x40] sm:$0xff] %v315
      %332 = vst [vmem:[%s116 + $0x48] sm:$0xff] %v316
      %333 = vst [vmem:[%s116 + $0x50] sm:$0xff] %v317
      %334 = vst [vmem:[%s116 + $0x58] sm:$0xff] %v318
      %335 = vst [vmem:[%s116 + $0x60] sm:$0xff] %v319
      %336 = vst [vmem:[%s116 + $0x68] sm:$0xff] %v320
      %337 = vst [vmem:[%s116 + $0x70] sm:$0xff] %v321
      %338 = vst [vmem:[%s116 + $0x78] sm:$0xff] %v322
      %p339 = scmp.lt.s32.totalorder %s12, 1
      %s340 = scalar_select %p339, %s12, 1
      %s341 = smul.addr %s340, 16
      %s342 = smul.addr %s341, 8
      %s343 = scalar_lea.vmem %s1, %s342
      // Predicated region
      $region25: #{train_step.2} parent=23 // pred_check
        %p344 = pneg %p56
      $region26: #{train_step.2} parent=23 // pred_check_branch
        %346 = sbr.rel (%p344) target = $region28
      $region27: #{train_step.2} parent=23 // pred_region
        _
      $region28: #{train_step.2} parent=23 // pred_fallthru
        _
    $region24: #{train_step.2} parent=5 // pred_fallthru
      _
    %p347 = scmp.le.s32.totalorder 2, %s7
    // Predicated region
    $region29: #{train_step.2} parent=5 // pred_check
      %p348 = pneg %p347
    $region30: #{train_step.2} parent=5 // pred_check_branch
      %350 = sbr.rel (%p348) target = $region32
    $region31: #{train_step.2} parent=5 // pred_region
      %s351 = ssub.s32 %s7, 2
      // Predicated region
      $region33: #{train_step.2} parent=31 // pred_check
        %p352 = pneg %p62
      $region34: #{train_step.2} parent=31 // pred_check_branch
        %354 = sbr.rel (%p352) target = $region36
      $region35: #{train_step.2} parent=31 // pred_region
        %p355 = scmp.lt.s32.totalorder %s13, 1
        %s356 = scalar_select %p355, %s13, 1
        %s357 = smul.addr %s356, 16
        %s358 = smul.addr %s357, 8
        %s359 = scalar_lea.vmem %s1, %s358
      $region36: #{train_step.2} parent=31 // pred_fallthru
        _
    $region32: #{train_step.2} parent=5 // pred_fallthru
      _
  $region6: #{train_step.2} parent=0 // loop_footer
    %s11 = sadd.s32 1, %s7
  $region7: #{train_step.2} parent=0 // loop_footer_branch
    %6 = sbr.rel target = $region3
  $region8: #{train_step.2} parent=0 // loop_exit
    _

// kernel: train_step.3
$region0: #{train_step.3}
  #allocation0 [shape = 'u32[]', space=smem, size = 0x4, offset = 0x4, fixed_abs, tag = 'smem constant byte address 0x4 - core index']
  #allocation1 [shape = 'u32[144,128]{1,0:T(1,128)}', space=vmem, size = 0x12000, scoped, tag = 'internal scratch']
  #allocation2 [shape = 'f32[1,1]{1,0:T(1,128)S(1)}', space=vmem, size = 0x200, scoped, tag = 'scoped memory for train_step.3']
  %s0 = inlined_call_operand.<no memory space> [shape: f32[1,1], index: 0, kind: input, shape index: {}]
  %s1 = inlined_call_operand.vmem [shape: f32[8,1], index: 1, kind: input, shape index: {}]
  %s2 = inlined_call_operand.vmem [shape: f32[192,512], index: 2, kind: input, shape index: {}]
  %s3 = inlined_call_operand.vmem [shape: f32[64,512], index: 3, kind: input, shape index: {}]
  %s4 = inlined_call_operand.vmem [shape: f32[8,512], index: 4, kind: input, shape index: {}]
  %s5 = inlined_call_operand.vmem [shape: bf16[8,512], index: 5, kind: input, shape index: {}]
  %s6 = inlined_call_operand.vmem [shape: bf16[8,192], index: 6, kind: input, shape index: {}]
  %s7 = inlined_call_operand.vmem [shape: bf16[8,64], index: 7, kind: input, shape index: {}]
  %s8 = inlined_call_operand.vmem [shape: bf16[8,8], index: 8, kind: input, shape index: {}]
  %s9 = inlined_call_operand.vmem [shape: bf16[8,8], index: 9, kind: input, shape index: {}]
  %s10 = inlined_call_operand.vmem [shape: bf16[192,8], index: 10, kind: input, shape index: {}]
  %s11 = inlined_call_operand.vmem [shape: f32[4,8,128], index: 11, kind: output, shape index: {0}]
  %s12 = inlined_call_operand.vmem [shape: f32[4,8,128], index: 12, kind: output, shape index: {1}]
  %13 = xla_tuple %s11, %s12
  %s14 = sld [smem:[#allocation0]]
  $region161: #{train_step.3} parent=0
    _
  %s16 = ssub.s32 1, %s14
  %s17 = scalar_select 0, %s16, %s14
  %v18 = vstv %s0
  %19 = vst [vmem:[#allocation2] sm:$0x1] %v18
  $region1: #{train_step.3} parent=0
    #allocation3 [shape = 'u8[196608]{0}', space=vmem, size = 0x30000, scoped, tag = 'input window, operand 2']
    #allocation4 [shape = 'u8[65536]{0}', space=vmem, size = 0x10000, scoped, tag = 'input window, operand 3']
    loop: start=0, step=1, limit=6
    $region2: #{train_step.3} parent=1 // loop_pre_header
      _
    $region3: #{train_step.3} parent=1 // loop_header
      %s21 = sphi 0, %s25
      %p22 = scmp.ge.s32.totalorder %s21, 6
      %s29 = sphi 0, %s29
      %s31 = sphi 0, %s29
      %s32 = sphi 0, %s31
      %s46 = sphi 0, %s32
      %s50 = sphi 0, %s50
      %s52 = sphi 0, %s50
      %s53 = sphi 0, %s52
      %s67 = sphi 0, %s53
      %s73 = sphi 0, %s75
      %s76 = sphi 0, %s73
      %s77 = sphi 0, %s76
      %s93 = sphi 0, %s77
      %s99 = sphi 0, %s101
      %s102 = sphi 0, %s99
      %s103 = sphi 0, %s102
      %s119 = sphi 0, %s103
      %s125 = sphi 0, %s127
      %s128 = sphi 0, %s125
      %s129 = sphi 0, %s128
      %s145 = sphi 0, %s129
      %s151 = sphi 0, %s153
      %s154 = sphi 0, %s151
      %s155 = sphi 0, %s154
      %s171 = sphi 0, %s155
      %s175 = sphi 0, %s175
      %s177 = sphi 0, %s175
      %s178 = sphi 0, %s177
      %s192 = sphi 0, %s178
      %s196 = sphi 0, %s196
      %s198 = sphi 0, %s196
      %s199 = sphi 0, %s198
      %s213 = sphi 0, %s199
      %s217 = sphi 0, %s217
      %s219 = sphi 0, %s217
      %s220 = sphi 0, %s219
      %s234 = sphi 0, %s220
      %s238 = sphi 0, %s238
      %s240 = sphi 0, %s238
      %s241 = sphi 0, %s240
      %s255 = sphi 0, %s241
      %s259 = sphi 0, %s259
      %s261 = sphi 0, %s259
      %s262 = sphi 0, %s261
      %s276 = sphi 0, %s262
      %s282 = sphi 0, %s284
      %s285 = sphi 0, %s282
      %s286 = sphi 0, %s285
      %s302 = sphi 0, %s286
      %s308 = sphi 0, %s310
      %s311 = sphi 0, %s308
      %s312 = sphi 0, %s311
      %s328 = sphi 0, %s312
    $region4: #{train_step.3} parent=1 // loop_header_branch
      %24 = sbr.rel (%p22) target = $region8
    $region5: #{train_step.3} parent=1 // loop_body
      %s26 = ssub.s32 %s21, 1
      %s27 = ssub.s32 %s21, 2
      %s28 = sadd.s32 %s21, 1
      %s30 = sadd.s32 %s29, 1
      %p33 = scmp.eq.s32.totalorder %s21, 3
      %p34 = scmp.ne.s32.totalorder %s29, %s31
      %p35 = scmp.eq.s32.totalorder %s21, 0
      %p36 = por %p34, %p35
      %p37 = scmp.ne.s32.totalorder %s29, %s31
      %p38 = scmp.eq.s32.totalorder %s26, 3
      %p39 = por %p37, %p38
      %p40 = scmp.ne.s32.totalorder %s31, %s32
      %p41 = scmp.eq.s32.totalorder %s26, 0
      %p42 = por %p40, %p41
      %p43 = scmp.ne.s32.totalorder %s31, %s32
      %p44 = scmp.eq.s32.totalorder %s27, 3
      %p45 = por %p43, %p44
      %p47 = scmp.ne.s32.totalorder %s32, %s46
      %p48 = scmp.eq.s32.totalorder %s27, 0
      %p49 = por %p47, %p48
      %s51 = sadd.s32 %s50, 1
      %p54 = scmp.eq.s32.totalorder %s21, 3
      %p55 = scmp.ne.s32.totalorder %s50, %s52
      %p56 = scmp.eq.s32.totalorder %s21, 0
      %p57 = por %p55, %p56
      %p58 = scmp.ne.s32.totalorder %s50, %s52
      %p59 = scmp.eq.s32.totalorder %s26, 3
      %p60 = por %p58, %p59
      %p61 = scmp.ne.s32.totalorder %s52, %s53
      %p62 = scmp.eq.s32.totalorder %s26, 0
      %p63 = por %p61, %p62
      %p64 = scmp.ne.s32.totalorder %s52, %s53
      %p65 = scmp.eq.s32.totalorder %s27, 3
      %p66 = por %p64, %p65
      %p68 = scmp.ne.s32.totalorder %s53, %s67
      %p69 = scmp.eq.s32.totalorder %s27, 0
      %p70 = por %p68, %p69
      %s71 = ssub.s32 %s21, %s28
      %p72 = scmp.eq.s32.totalorder %s71, 0
      %s74 = sadd.s32 %s73, 1
      %s75 = scalar_select %p72, %s73, %s74
      %p78 = pneg %p72
      %p79 = scmp.eq.s32.totalorder %s21, 3
      %p80 = por %p78, %p79
      %p81 = scmp.ne.s32.totalorder %s73, %s76
      %p82 = scmp.eq.s32.totalorder %s21, 0
      %p83 = por %p81, %p82
      %p84 = scmp.ne.s32.totalorder %s73, %s76
      %p85 = scmp.eq.s32.totalorder %s26, 3
      %p86 = por %p84, %p85
      %p87 = scmp.ne.s32.totalorder %s76, %s77
      %p88 = scmp.eq.s32.totalorder %s26, 0
      %p89 = por %p87, %p88
      %p90 = scmp.ne.s32.totalorder %s76, %s77
      %p91 = scmp.eq.s32.totalorder %s27, 3
      %p92 = por %p90, %p91
      %p94 = scmp.ne.s32.totalorder %s77, %s93
      %p95 = scmp.eq.s32.totalorder %s27, 0
      %p96 = por %p94, %p95
      %s97 = ssub.s32 %s21, %s28
      %p98 = scmp.eq.s32.totalorder %s97, 0
      %s100 = sadd.s32 %s99, 1
      %s101 = scalar_select %p98, %s99, %s100
      %p104 = pneg %p98
      %p105 = scmp.eq.s32.totalorder %s21, 3
      %p106 = por %p104, %p105
      %p107 = scmp.ne.s32.totalorder %s99, %s102
      %p108 = scmp.eq.s32.totalorder %s21, 0
      %p109 = por %p107, %p108
      %p110 = scmp.ne.s32.totalorder %s99, %s102
      %p111 = scmp.eq.s32.totalorder %s26, 3
      %p112 = por %p110, %p111
      %p113 = scmp.ne.s32.totalorder %s102, %s103
      %p114 = scmp.eq.s32.totalorder %s26, 0
      %p115 = por %p113, %p114
      %p116 = scmp.ne.s32.totalorder %s102, %s103
      %p117 = scmp.eq.s32.totalorder %s27, 3
      %p118 = por %p116, %p117
      %p120 = scmp.ne.s32.totalorder %s103, %s119
      %p121 = scmp.eq.s32.totalorder %s27, 0
      %p122 = por %p120, %p121
      %s123 = ssub.s32 %s21, %s28
      %p124 = scmp.eq.s32.totalorder %s123, 0
      %s126 = sadd.s32 %s125, 1
      %s127 = scalar_select %p124, %s125, %s126
      %p130 = pneg %p124
      %p131 = scmp.eq.s32.totalorder %s21, 3
      %p132 = por %p130, %p131
      %p133 = scmp.ne.s32.totalorder %s125, %s128
      %p134 = scmp.eq.s32.totalorder %s21, 0
      %p135 = por %p133, %p134
      %p136 = scmp.ne.s32.totalorder %s125, %s128
      %p137 = scmp.eq.s32.totalorder %s26, 3
      %p138 = por %p136, %p137
      %p139 = scmp.ne.s32.totalorder %s128, %s129
      %p140 = scmp.eq.s32.totalorder %s26, 0
      %p141 = por %p139, %p140
      %p142 = scmp.ne.s32.totalorder %s128, %s129
      %p143 = scmp.eq.s32.totalorder %s27, 3
      %p144 = por %p142, %p143
      %p146 = scmp.ne.s32.totalorder %s129, %s145
      %p147 = scmp.eq.s32.totalorder %s27, 0
      %p148 = por %p146, %p147
      %s149 = ssub.s32 %s21, %s28
      %p150 = scmp.eq.s32.totalorder %s149, 0
      %s152 = sadd.s32 %s151, 1
      %s153 = scalar_select %p150, %s151, %s152
      %p156 = pneg %p150
      %p157 = scmp.eq.s32.totalorder %s21, 3
      %p158 = por %p156, %p157
      %p159 = scmp.ne.s32.totalorder %s151, %s154
      %p160 = scmp.eq.s32.totalorder %s21, 0
      %p161 = por %p159, %p160
      %p162 = scmp.ne.s32.totalorder %s151, %s154
      %p163 = scmp.eq.s32.totalorder %s26, 3
      %p164 = por %p162, %p163
      %p165 = scmp.ne.s32.totalorder %s154, %s155
      %p166 = scmp.eq.s32.totalorder %s26, 0
      %p167 = por %p165, %p166
      %p168 = scmp.ne.s32.totalorder %s154, %s155
      %p169 = scmp.eq.s32.totalorder %s27, 3
      %p170 = por %p168, %p169
      %p172 = scmp.ne.s32.totalorder %s155, %s171
      %p173 = scmp.eq.s32.totalorder %s27, 0
      %p174 = por %p172, %p173
      %s176 = sadd.s32 %s175, 1
      %p179 = scmp.eq.s32.totalorder %s21, 3
      %p180 = scmp.ne.s32.totalorder %s175, %s177
      %p181 = scmp.eq.s32.totalorder %s21, 0
      %p182 = por %p180, %p181
      %p183 = scmp.ne.s32.totalorder %s175, %s177
      %p184 = scmp.eq.s32.totalorder %s26, 3
      %p185 = por %p183, %p184
      %p186 = scmp.ne.s32.totalorder %s177, %s178
      %p187 = scmp.eq.s32.totalorder %s26, 0
      %p188 = por %p186, %p187
      %p189 = scmp.ne.s32.totalorder %s177, %s178
      %p190 = scmp.eq.s32.totalorder %s27, 3
      %p191 = por %p189, %p190
      %p193 = scmp.ne.s32.totalorder %s178, %s192
      %p194 = scmp.eq.s32.totalorder %s27, 0
      %p195 = por %p193, %p194
      %s197 = sadd.s32 %s196, 1
      %p200 = scmp.eq.s32.totalorder %s21, 3
      %p201 = scmp.ne.s32.totalorder %s196, %s198
      %p202 = scmp.eq.s32.totalorder %s21, 0
      %p203 = por %p201, %p202
      %p204 = scmp.ne.s32.totalorder %s196, %s198
      %p205 = scmp.eq.s32.totalorder %s26, 3
      %p206 = por %p204, %p205
      %p207 = scmp.ne.s32.totalorder %s198, %s199
      %p208 = scmp.eq.s32.totalorder %s26, 0
      %p209 = por %p207, %p208
      %p210 = scmp.ne.s32.totalorder %s198, %s199
      %p211 = scmp.eq.s32.totalorder %s27, 3
      %p212 = por %p210, %p211
      %p214 = scmp.ne.s32.totalorder %s199, %s213
      %p215 = scmp.eq.s32.totalorder %s27, 0
      %p216 = por %p214, %p215
      %s218 = sadd.s32 %s217, 1
      %p221 = scmp.eq.s32.totalorder %s21, 3
      %p222 = scmp.ne.s32.totalorder %s217, %s219
      %p223 = scmp.eq.s32.totalorder %s21, 0
      %p224 = por %p222, %p223
      %p225 = scmp.ne.s32.totalorder %s217, %s219
      %p226 = scmp.eq.s32.totalorder %s26, 3
      %p227 = por %p225, %p226
      %p228 = scmp.ne.s32.totalorder %s219, %s220
      %p229 = scmp.eq.s32.totalorder %s26, 0
      %p230 = por %p228, %p229
      %p231 = scmp.ne.s32.totalorder %s219, %s220
      %p232 = scmp.eq.s32.totalorder %s27, 3
      %p233 = por %p231, %p232
      %p235 = scmp.ne.s32.totalorder %s220, %s234
      %p236 = scmp.eq.s32.totalorder %s27, 0
      %p237 = por %p235, %p236
      %s239 = sadd.s32 %s238, 1
      %p242 = scmp.eq.s32.totalorder %s21, 3
      %p243 = scmp.ne.s32.totalorder %s238, %s240
      %p244 = scmp.eq.s32.totalorder %s21, 0
      %p245 = por %p243, %p244
      %p246 = scmp.ne.s32.totalorder %s238, %s240
      %p247 = scmp.eq.s32.totalorder %s26, 3
      %p248 = por %p246, %p247
      %p249 = scmp.ne.s32.totalorder %s240, %s241
      %p250 = scmp.eq.s32.totalorder %s26, 0
      %p251 = por %p249, %p250
      %p252 = scmp.ne.s32.totalorder %s240, %s241
      %p253 = scmp.eq.s32.totalorder %s27, 3
      %p254 = por %p252, %p253
      %p256 = scmp.ne.s32.totalorder %s241, %s255
      %p257 = scmp.eq.s32.totalorder %s27, 0
      %p258 = por %p256, %p257
      %s260 = sadd.s32 %s259, 1
      %p263 = scmp.eq.s32.totalorder %s21, 3
      %p264 = scmp.ne.s32.totalorder %s259, %s261
      %p265 = scmp.eq.s32.totalorder %s21, 0
      %p266 = por %p264, %p265
      %p267 = scmp.ne.s32.totalorder %s259, %s261
      %p268 = scmp.eq.s32.totalorder %s26, 3
      %p269 = por %p267, %p268
      %p270 = scmp.ne.s32.totalorder %s261, %s262
      %p271 = scmp.eq.s32.totalorder %s26, 0
      %p272 = por %p270, %p271
      %p273 = scmp.ne.s32.totalorder %s261, %s262
      %p274 = scmp.eq.s32.totalorder %s27, 3
      %p275 = por %p273, %p274
      %p277 = scmp.ne.s32.totalorder %s262, %s276
      %p278 = scmp.eq.s32.totalorder %s27, 0
      %p279 = por %p277, %p278
      %s280 = ssub.s32 %s21, %s28
      %p281 = scmp.eq.s32.totalorder %s280, 0
      %s283 = sadd.s32 %s282, 1
      %s284 = scalar_select %p281, %s282, %s283
      %p287 = pneg %p281
      %p288 = scmp.eq.s32.totalorder %s21, 3
      %p289 = por %p287, %p288
      %p290 = scmp.ne.s32.totalorder %s282, %s285
      %p291 = scmp.eq.s32.totalorder %s21, 0
      %p292 = por %p290, %p291
      %p293 = scmp.ne.s32.totalorder %s282, %s285
      %p294 = scmp.eq.s32.totalorder %s26, 3
      %p295 = por %p293, %p294
      %p296 = scmp.ne.s32.totalorder %s285, %s286
      %p297 = scmp.eq.s32.totalorder %s26, 0
      %p298 = por %p296, %p297
      %p299 = scmp.ne.s32.totalorder %s285, %s286
      %p300 = scmp.eq.s32.totalorder %s27, 3
      %p301 = por %p299, %p300
      %p303 = scmp.ne.s32.totalorder %s286, %s302
      %p304 = scmp.eq.s32.totalorder %s27, 0
      %p305 = por %p303, %p304
      %s306 = ssub.s32 %s21, %s28
      %p307 = scmp.eq.s32.totalorder %s306, 0
      %s309 = sadd.s32 %s308, 1
      %s310 = scalar_select %p307, %s308, %s309
      %p313 = pneg %p307
      %p314 = scmp.eq.s32.totalorder %s21, 3
      %p315 = por %p313, %p314
      %p316 = scmp.ne.s32.totalorder %s308, %s311
      %p317 = scmp.eq.s32.totalorder %s21, 0
      %p318 = por %p316, %p317
      %p319 = scmp.ne.s32.totalorder %s308, %s311
      %p320 = scmp.eq.s32.totalorder %s26, 3
      %p321 = por %p319, %p320
      %p322 = scmp.ne.s32.totalorder %s311, %s312
      %p323 = scmp.eq.s32.totalorder %s26, 0
      %p324 = por %p322, %p323
      %p325 = scmp.ne.s32.totalorder %s311, %s312
      %p326 = scmp.eq.s32.totalorder %s27, 3
      %p327 = por %p325, %p326
      %p329 = scmp.ne.s32.totalorder %s312, %s328
      %p330 = scmp.eq.s32.totalorder %s27, 0
      %p331 = por %p329, %p330
      %p332 = scmp.le.s32.totalorder 1, %s21
      %p333 = scmp.lt.s32.totalorder %s21, 5
      %p334 = pnand %p332, %p333
      %p335 = pneg %p334
      // Predicated region
      $region9: #{train_step.3} parent=5 // pred_check
        _
      $region10: #{train_step.3} parent=5 // pred_check_branch
        %337 = sbr.rel (%p334) target = $region12
      $region11: #{train_step.3} parent=5 // pred_region
        %s338 = ssub.s32 %s21, 1
        // Predicated region
        $region13: #{train_step.3} parent=11 // pred_check
          %p339 = pneg %p42
        $region14: #{train_step.3} parent=11 // pred_check_branch
          %341 = sbr.rel (%p339) target = $region16
        $region15: #{train_step.3} parent=11 // pred_region
          _
        $region16: #{train_step.3} parent=11 // pred_fallthru
          _
        // Predicated region
        $region17: #{train_step.3} parent=11 // pred_check
          %p342 = pneg %p63
        $region18: #{train_step.3} parent=11 // pred_check_branch
          %344 = sbr.rel (%p342) target = $region20
        $region19: #{train_step.3} parent=11 // pred_region
          _
        $region20: #{train_step.3} parent=11 // pred_fallthru
          _
        // Predicated region
        $region21: #{train_step.3} parent=11 // pred_check
          %p345 = pneg %p188
        $region22: #{train_step.3} parent=11 // pred_check_branch
          %347 = sbr.rel (%p345) target = $region24
        $region23: #{train_step.3} parent=11 // pred_region
          _
        $region24: #{train_step.3} parent=11 // pred_fallthru
          _
        // Predicated region
        $region25: #{train_step.3} parent=11 // pred_check
          %p348 = pneg %p209
        $region26: #{train_step.3} parent=11 // pred_check_branch
          %350 = sbr.rel (%p348) target = $region28
        $region27: #{train_step.3} parent=11 // pred_region
          _
        $region28: #{train_step.3} parent=11 // pred_fallthru
          _
        // Predicated region
        $region29: #{train_step.3} parent=11 // pred_check
          %p351 = pneg %p230
        $region30: #{train_step.3} parent=11 // pred_check_branch
          %353 = sbr.rel (%p351) target = $region32
        $region31: #{train_step.3} parent=11 // pred_region
          _
        $region32: #{train_step.3} parent=11 // pred_fallthru
          _
        // Predicated region
        $region33: #{train_step.3} parent=11 // pred_check
          %p354 = pneg %p251
        $region34: #{train_step.3} parent=11 // pred_check_branch
          %356 = sbr.rel (%p354) target = $region36
        $region35: #{train_step.3} parent=11 // pred_region
          _
        $region36: #{train_step.3} parent=11 // pred_fallthru
          _
        // Predicated region
        $region37: #{train_step.3} parent=11 // pred_check
          %p357 = pneg %p272
        $region38: #{train_step.3} parent=11 // pred_check_branch
          %359 = sbr.rel (%p357) target = $region40
        $region39: #{train_step.3} parent=11 // pred_region
          _
        $region40: #{train_step.3} parent=11 // pred_fallthru
          _
      $region12: #{train_step.3} parent=5 // pred_fallthru
        _
      %p360 = scmp.lt.s32.totalorder %s21, 4
      // Predicated region
      $region41: #{train_step.3} parent=5 // pred_check
        %p361 = pneg %p360
      $region42: #{train_step.3} parent=5 // pred_check_branch
        %363 = sbr.rel (%p361) target = $region44
      $region43: #{train_step.3} parent=5 // pred_region
        // Predicated region
        $region45: #{train_step.3} parent=43 // pred_check
          %p364 = pneg %p83
        $region46: #{train_step.3} parent=43 // pred_check_branch
          %366 = sbr.rel (%p364) target = $region48
        $region47: #{train_step.3} parent=43 // pred_region
          %s367 = sand.u32 %s73, 1
          %s368 = sand.u32 %s73, 1
          %s369 = smul.addr %s368, 192
          %s370 = scalar_lea.vmem [#allocation3], %s369
          %s371 = smul.addr %s21, 8
          %s372 = scalar_lea.vmem %s2, %s371
          // Predicated region
          $region49: #{train_step.3} parent=47 // pred_check
            _
          $region50: #{train_step.3} parent=47 // pred_check_branch
            %374 = sbr.rel (0) target = $region52
          $region51: #{train_step.3} parent=47 // pred_region
            // Predicated region
            $region53: #{train_step.3} parent=51 // pred_check
              _
            $region54: #{train_step.3} parent=51 // pred_check_branch
              %376 = sbr.rel (0) target = $region56
            $region55: #{train_step.3} parent=51 // pred_region
              // Predicated region
              $region68: #{train_step.3} parent=55 // pred_check
                _
              $region69: #{train_step.3} parent=55 // pred_check_branch
                %438 = sbr.rel (0) target = $region71
              $region70: #{train_step.3} parent=55 // pred_region
                loop: start=0, step=1, limit=1
                $region72: #{train_step.3} parent=70 // loop_pre_header
                  _
                $region73: #{train_step.3} parent=70 // loop_header
                  %s440 = sphi 0, %s444
                  %p441 = scmp.ge.s32.totalorder %s440, 1
                  %s445 = sphi %s372, %s372
                  %s446 = sphi %s370, %s370
                $region74: #{train_step.3} parent=70 // loop_header_branch
                  %443 = sbr.rel (%p441) target = $region78
                $region75: #{train_step.3} parent=70 // loop_body
                  %v447 = vld [vmem:[%s445] sm:$0xff]
                  %448 = vst [vmem:[%s446] sm:$0xff] %v447
                  %v449 = vld [vmem:[%s445 + $0x20] sm:$0xff]
                  %450 = vst [vmem:[%s446 + $0x8] sm:$0xff] %v449
                  %v451 = vld [vmem:[%s445 + $0x40] sm:$0xff]
                  %452 = vst [vmem:[%s446 + $0x10] sm:$0xff] %v451
                  %v453 = vld [vmem:[%s445 + $0x60] sm:$0xff]
                  %454 = vst [vmem:[%s446 + $0x18] sm:$0xff] %v453
                  %v455 = vld [vmem:[%s445 + $0x80] sm:$0xff]
                  %456 = vst [vmem:[%s446 + $0x20] sm:$0xff] %v455
                  %v457 = vld [vmem:[%s445 + $0xa0] sm:$0xff]
                  %458 = vst [vmem:[%s446 + $0x28] sm:$0xff] %v457
                  %v459 = vld [vmem:[%s445 + $0xc0] sm:$0xff]
                  %460 = vst [vmem:[%s446 + $0x30] sm:$0xff] %v459
                  %v461 = vld [vmem:[%s445 + $0xe0] sm:$0xff]
                  %462 = vst [vmem:[%s446 + $0x38] sm:$0xff] %v461
                  %v463 = vld [vmem:[%s445 + $0x100] sm:$0xff]
                  %464 = vst [vmem:[%s446 + $0x40] sm:$0xff] %v463
                  %v465 = vld [vmem:[%s445 + $0x120] sm:$0xff]
                  %466 = vst [vmem:[%s446 + $0x48] sm:$0xff] %v465
                  %v467 = vld [vmem:[%s445 + $0x140] sm:$0xff]
                  %468 = vst [vmem:[%s446 + $0x50] sm:$0xff] %v467
                  %v469 = vld [vmem:[%s445 + $0x160] sm:$0xff]
                  %470 = vst [vmem:[%s446 + $0x58] sm:$0xff] %v469
                  %v471 = vld [vmem:[%s445 + $0x180] sm:$0xff]
                  %472 = vst [vmem:[%s446 + $0x60] sm:$0xff] %v471
                  %v473 = vld [vmem:[%s445 + $0x1a0] sm:$0xff]
                  %474 = vst [vmem:[%s446 + $0x68] sm:$0xff] %v473
                  %v475 = vld [vmem:[%s445 + $0x1c0] sm:$0xff]
                  %476 = vst [vmem:[%s446 + $0x70] sm:$0xff] %v475
                  %v477 = vld [vmem:[%s445 + $0x1e0] sm:$0xff]
                  %478 = vst [vmem:[%s446 + $0x78] sm:$0xff] %v477
                  %v479 = vld [vmem:[%s445 + $0x200] sm:$0xff]
                  %480 = vst [vmem:[%s446 + $0x80] sm:$0xff] %v479
                  %v481 = vld [vmem:[%s445 + $0x220] sm:$0xff]
                  %482 = vst [vmem:[%s446 + $0x88] sm:$0xff] %v481
                  %v483 = vld [vmem:[%s445 + $0x240] sm:$0xff]
                  %484 = vst [vmem:[%s446 + $0x90] sm:$0xff] %v483
                  %v485 = vld [vmem:[%s445 + $0x260] sm:$0xff]
                  %486 = vst [vmem:[%s446 + $0x98] sm:$0xff] %v485
                  %v487 = vld [vmem:[%s445 + $0x280] sm:$0xff]
                  %488 = vst [vmem:[%s446 + $0xa0] sm:$0xff] %v487
                  %v489 = vld [vmem:[%s445 + $0x2a0] sm:$0xff]
                  %490 = vst [vmem:[%s446 + $0xa8] sm:$0xff] %v489
                  %v491 = vld [vmem:[%s445 + $0x2c0] sm:$0xff]
                  %492 = vst [vmem:[%s446 + $0xb0] sm:$0xff] %v491
                  %v493 = vld [vmem:[%s445 + $0x2e0] sm:$0xff]
                  %494 = vst [vmem:[%s446 + $0xb8] sm:$0xff] %v493
                $region76: #{train_step.3} parent=70 // loop_footer
                  %s444 = sadd.s32 1, %s440
                $region77: #{train_step.3} parent=70 // loop_footer_branch
                  %439 = sbr.rel target = $region73
                $region78: #{train_step.3} parent=70 // loop_exit
                  _
              $region71: #{train_step.3} parent=55 // pred_fallthru
                _
              // Predicated region
              $region79: #{train_step.3} parent=55 // pred_check
                _
              $region80: #{train_step.3} parent=55 // pred_check_branch
                %496 = sbr.rel target = $region82
              $region81: #{train_step.3} parent=55 // pred_region
                _
              $region82: #{train_step.3} parent=55 // pred_fallthru
                _
            $region56: #{train_step.3} parent=51 // pred_fallthru
              _
            // Predicated region
            $region57: #{train_step.3} parent=51 // pred_check
              _
            $region58: #{train_step.3} parent=51 // pred_check_branch
              %378 = sbr.rel target = $region60
            $region59: #{train_step.3} parent=51 // pred_region
              %s380 = ssub.s32 256, 1
              loop: start=0, step=1, limit=1
              $region61: #{train_step.3} parent=59 // loop_pre_header
                _
              $region62: #{train_step.3} parent=59 // loop_header
                %s382 = sphi 0, %s386
                %p383 = scmp.ge.s32.totalorder %s382, 1
                %s387 = sphi %s372, %s372
                %s388 = sphi %s370, %s370
              $region63: #{train_step.3} parent=59 // loop_header_branch
                %385 = sbr.rel (%p383) target = $region67
              $region64: #{train_step.3} parent=59 // loop_body
                %v389 = vld [vmem:[%s387] sm:%s380]
                %390 = vst [vmem:[%s388] sm:%s380] %v389
                %v391 = vld [vmem:[%s387 + $0x20] sm:%s380]
                %392 = vst [vmem:[%s388 + $0x8] sm:%s380] %v391
                %v393 = vld [vmem:[%s387 + $0x40] sm:%s380]
                %394 = vst [vmem:[%s388 + $0x10] sm:%s380] %v393
                %v395 = vld [vmem:[%s387 + $0x60] sm:%s380]
                %396 = vst [vmem:[%s388 + $0x18] sm:%s380] %v395
                %v397 = vld [vmem:[%s387 + $0x80] sm:%s380]
                %398 = vst [vmem:[%s388 + $0x20] sm:%s380] %v397
                %v399 = vld [vmem:[%s387 + $0xa0] sm:%s380]
                %400 = vst [vmem:[%s388 + $0x28] sm:%s380] %v399
                %v401 = vld [vmem:[%s387 + $0xc0] sm:%s380]
                %402 = vst [vmem:[%s388 + $0x30] sm:%s380] %v401
                %v403 = vld [vmem:[%s387 + $0xe0] sm:%s380]
                %404 = vst [vmem:[%s388 + $0x38] sm:%s380] %v403
                %v405 = vld [vmem:[%s387 + $0x100] sm:%s380]
                %406 = vst [vmem:[%s388 + $0x40] sm:%s380] %v405
                %v407 = vld [vmem:[%s387 + $0x120] sm:%s380]
                %408 = vst [vmem:[%s388 + $0x48] sm:%s380] %v407
                %v409 = vld [vmem:[%s387 + $0x140] sm:%s380]
                %410 = vst [vmem:[%s388 + $0x50] sm:%s380] %v409
                %v411 = vld [vmem:[%s387 + $0x160] sm:%s380]
                %412 = vst [vmem:[%s388 + $0x58] sm:%s380] %v411
                %v413 = vld [vmem:[%s387 + $0x180] sm:%s380]
                %414 = vst [vmem:[%s388 + $0x60] sm:%s380] %v413
                %v415 = vld [vmem:[%s387 + $0x1a0] sm:%s380]
                %416 = vst [vmem:[%s388 + $0x68] sm:%s380] %v415
                %v417 = vld [vmem:[%s387 + $0x1c0] sm:%s380]
                %418 = vst [vmem:[%s388 + $0x70] sm:%s380] %v417
                %v419 = vld [vmem:[%s387 + $0x1e0] sm:%s380]
                %420 = vst [vmem:[%s388 + $0x78] sm:%s380] %v419
                %v421 = vld [vmem:[%s387 + $0x200] sm:%s380]
                %422 = vst [vmem:[%s388 + $0x80] sm:%s380] %v421
                %v423 = vld [vmem:[%s387 + $0x220] sm:%s380]
                %424 = vst [vmem:[%s388 + $0x88] sm:%s380] %v423
                %v425 = vld [vmem:[%s387 + $0x240] sm:%s380]
                %426 = vst [vmem:[%s388 + $0x90] sm:%s380] %v425
                %v427 = vld [vmem:[%s387 + $0x260] sm:%s380]
                %428 = vst [vmem:[%s388 + $0x98] sm:%s380] %v427
                %v429 = vld [vmem:[%s387 + $0x280] sm:%s380]
                %430 = vst [vmem:[%s388 + $0xa0] sm:%s380] %v429
                %v431 = vld [vmem:[%s387 + $0x2a0] sm:%s380]
                %432 = vst [vmem:[%s388 + $0xa8] sm:%s380] %v431
                %v433 = vld [vmem:[%s387 + $0x2c0] sm:%s380]
                %434 = vst [vmem:[%s388 + $0xb0] sm:%s380] %v433
                %v435 = vld [vmem:[%s387 + $0x2e0] sm:%s380]
                %436 = vst [vmem:[%s388 + $0xb8] sm:%s380] %v435
              $region65: #{train_step.3} parent=59 // loop_footer
                %s386 = sadd.s32 1, %s382
              $region66: #{train_step.3} parent=59 // loop_footer_branch
                %381 = sbr.rel target = $region62
              $region67: #{train_step.3} parent=59 // loop_exit
                _
            $region60: #{train_step.3} parent=51 // pred_fallthru
              _
          $region52: #{train_step.3} parent=47 // pred_fallthru
            _
          %497 = vnop
        $region48: #{train_step.3} parent=43 // pred_fallthru
          _
        // Predicated region
        $region83: #{train_step.3} parent=43 // pred_check
          %p498 = pneg %p109
        $region84: #{train_step.3} parent=43 // pred_check_branch
          %500 = sbr.rel (%p498) target = $region86
        $region85: #{train_step.3} parent=43 // pred_region
          %s501 = sand.u32 %s99, 1
          %s502 = sand.u32 %s99, 1
          %s503 = smul.addr %s502, 64
          %s504 = scalar_lea.vmem [#allocation4], %s503
          %s505 = smul.addr %s21, 8
          %s506 = scalar_lea.vmem %s3, %s505
          // Predicated region
          $region87: #{train_step.3} parent=85 // pred_check
            _
          $region88: #{train_step.3} parent=85 // pred_check_branch
            %508 = sbr.rel (0) target = $region90
          $region89: #{train_step.3} parent=85 // pred_region
            // Predicated region
            $region91: #{train_step.3} parent=89 // pred_check
              _
            $region92: #{train_step.3} parent=89 // pred_check_branch
              %510 = sbr.rel (0) target = $region94
            $region93: #{train_step.3} parent=89 // pred_region
              // Predicated region
              $region106: #{train_step.3} parent=93 // pred_check
                _
              $region107: #{train_step.3} parent=93 // pred_check_branch
                %540 = sbr.rel (0) target = $region109
              $region108: #{train_step.3} parent=93 // pred_region
                loop: start=0, step=1, limit=1
                $region110: #{train_step.3} parent=108 // loop_pre_header
                  _
                $region111: #{train_step.3} parent=108 // loop_header
                  %s542 = sphi 0, %s546
                  %p543 = scmp.ge.s32.totalorder %s542, 1
                  %s547 = sphi %s506, %s506
                  %s548 = sphi %s504, %s504
                $region112: #{train_step.3} parent=108 // loop_header_branch
                  %545 = sbr.rel (%p543) target = $region116
                $region113: #{train_step.3} parent=108 // loop_body
                  %v549 = vld [vmem:[%s547] sm:$0xff]
                  %550 = vst [vmem:[%s548] sm:$0xff] %v549
                  %v551 = vld [vmem:[%s547 + $0x20] sm:$0xff]
                  %552 = vst [vmem:[%s548 + $0x8] sm:$0xff] %v551
                  %v553 = vld [vmem:[%s547 + $0x40] sm:$0xff]
                  %554 = vst [vmem:[%s548 + $0x10] sm:$0xff] %v553
                  %v555 = vld [vmem:[%s547 + $0x60] sm:$0xff]
                  %556 = vst [vmem:[%s548 + $0x18] sm:$0xff] %v555
                  %v557 = vld [vmem:[%s547 + $0x80] sm:$0xff]
                  %558 = vst [vmem:[%s548 + $0x20] sm:$0xff] %v557
                  %v559 = vld [vmem:[%s547 + $0xa0] sm:$0xff]
                  %560 = vst [vmem:[%s548 + $0x28] sm:$0xff] %v559
                  %v561 = vld [vmem:[%s547 + $0xc0] sm:$0xff]
                  %562 = vst [vmem:[%s548 + $0x30] sm:$0xff] %v561
                  %v563 = vld [vmem:[%s547 + $0xe0] sm:$0xff]
                  %564 = vst [vmem:[%s548 + $0x38] sm:$0xff] %v563
                $region114: #{train_step.3} parent=108 // loop_footer
                  %s546 = sadd.s32 1, %s542
                $region115: #{train_step.3} parent=108 // loop_footer_branch
                  %541 = sbr.rel target = $region111
                $region116: #{train_step.3} parent=108 // loop_exit
                  _
              $region109: #{train_step.3} parent=93 // pred_fallthru
                _
              // Predicated region
              $region117: #{train_step.3} parent=93 // pred_check
                _
              $region118: #{train_step.3} parent=93 // pred_check_branch
                %566 = sbr.rel target = $region120
              $region119: #{train_step.3} parent=93 // pred_region
                _
              $region120: #{train_step.3} parent=93 // pred_fallthru
                _
            $region94: #{train_step.3} parent=89 // pred_fallthru
              _
            // Predicated region
            $region95: #{train_step.3} parent=89 // pred_check
              _
            $region96: #{train_step.3} parent=89 // pred_check_branch
              %512 = sbr.rel target = $region98
            $region97: #{train_step.3} parent=89 // pred_region
              %s514 = ssub.s32 256, 1
              loop: start=0, step=1, limit=1
              $region99: #{train_step.3} parent=97 // loop_pre_header
                _
              $region100: #{train_step.3} parent=97 // loop_header
                %s516 = sphi 0, %s520
                %p517 = scmp.ge.s32.totalorder %s516, 1
                %s521 = sphi %s506, %s506
                %s522 = sphi %s504, %s504
              $region101: #{train_step.3} parent=97 // loop_header_branch
                %519 = sbr.rel (%p517) target = $region105
              $region102: #{train_step.3} parent=97 // loop_body
                %v523 = vld [vmem:[%s521] sm:%s514]
                %524 = vst [vmem:[%s522] sm:%s514] %v523
                %v525 = vld [vmem:[%s521 + $0x20] sm:%s514]
                %526 = vst [vmem:[%s522 + $0x8] sm:%s514] %v525
                %v527 = vld [vmem:[%s521 + $0x40] sm:%s514]
                %528 = vst [vmem:[%s522 + $0x10] sm:%s514] %v527
                %v529 = vld [vmem:[%s521 + $0x60] sm:%s514]
                %530 = vst [vmem:[%s522 + $0x18] sm:%s514] %v529
                %v531 = vld [vmem:[%s521 + $0x80] sm:%s514]
                %532 = vst [vmem:[%s522 + $0x20] sm:%s514] %v531
                %v533 = vld [vmem:[%s521 + $0xa0] sm:%s514]
                %534 = vst [vmem:[%s522 + $0x28] sm:%s514] %v533
                %v535 = vld [vmem:[%s521 + $0xc0] sm:%s514]
                %536 = vst [vmem:[%s522 + $0x30] sm:%s514] %v535
                %v537 = vld [vmem:[%s521 + $0xe0] sm:%s514]
                %538 = vst [vmem:[%s522 + $0x38] sm:%s514] %v537
              $region103: #{train_step.3} parent=97 // loop_footer
                %s520 = sadd.s32 1, %s516
              $region104: #{train_step.3} parent=97 // loop_footer_branch
                %515 = sbr.rel target = $region100
              $region105: #{train_step.3} parent=97 // loop_exit
                _
            $region98: #{train_step.3} parent=89 // pred_fallthru
              _
          $region90: #{train_step.3} parent=85 // pred_fallthru
            _
          %567 = vnop
        $region86: #{train_step.3} parent=43 // pred_fallthru
          _
        // Predicated region
        $region121: #{train_step.3} parent=43 // pred_check
          %p568 = pneg %p135
        $region122: #{train_step.3} parent=43 // pred_check_branch
          %570 = sbr.rel (%p568) target = $region124
        $region123: #{train_step.3} parent=43 // pred_region
          %p571 = scmp.lt.s32.totalorder %s21, 3
          %s572 = scalar_select %p571, %s21, 3
          %s573 = smul.addr %s572, 8
          %s574 = scalar_lea.vmem %s4, %s573
        $region124: #{train_step.3} parent=43 // pred_fallthru
          _
        // Predicated region
        $region125: #{train_step.3} parent=43 // pred_check
          %p575 = pneg %p161
        $region126: #{train_step.3} parent=43 // pred_check_branch
          %577 = sbr.rel (%p575) target = $region128
        $region127: #{train_step.3} parent=43 // pred_region
          %p578 = scmp.lt.s32.totalorder %s21, 3
          %s579 = scalar_select %p578, %s21, 3
          %s580 = smul.addr %s579, 4
          %s581 = scalar_lea.vmem %s5, %s580
        $region128: #{train_step.3} parent=43 // pred_fallthru
          _
      $region44: #{train_step.3} parent=5 // pred_fallthru
        _
      %p582 = scmp.le.s32.totalorder 1, %s21
      %p583 = scmp.lt.s32.totalorder %s21, 5
      %p584 = pnand %p582, %p583
      %p585 = pneg %p584
      // Predicated region
      $region129: #{train_step.3} parent=5 // pred_check
        _
      $region130: #{train_step.3} parent=5 // pred_check_branch
        %587 = sbr.rel (%p584) target = $region132
      $region131: #{train_step.3} parent=5 // pred_region
        %s588 = ssub.s32 %s21, 1
        %s589 = sand.u32 %s76, 1
        %s590 = sand.u32 %s76, 1
        %s591 = smul.addr %s590, 192
        %s592 = scalar_lea.vmem [#allocation3], %s591
        // Predicated region
        $region133: #{train_step.3} parent=131 // pred_check
          %p593 = pneg %p89
        $region134: #{train_step.3} parent=131 // pred_check_branch
          %595 = sbr.rel (%p593) target = $region136
        $region135: #{train_step.3} parent=131 // pred_region
          _
        $region136: #{train_step.3} parent=131 // pred_fallthru
          _
        %s596 = sand.u32 %s102, 1
        %s597 = sand.u32 %s102, 1
        %s598 = smul.addr %s597, 64
        %s599 = scalar_lea.vmem [#allocation4], %s598
        // Predicated region
        $region137: #{train_step.3} parent=131 // pred_check
          %p600 = pneg %p115
        $region138: #{train_step.3} parent=131 // pred_check_branch
          %602 = sbr.rel (%p600) target = $region140
        $region139: #{train_step.3} parent=131 // pred_region
          _
        $region140: #{train_step.3} parent=131 // pred_fallthru
          _
        %p603 = pneg %p42
        %p604 = pneg %p39
        %p605 = pneg %p63
        %p606 = pneg %p60
        %s607 = sand.u32 %s76, 1
        %s608 = sand.u32 %s76, 1
        %s609 = smul.addr %s608, 192
        %s610 = scalar_lea.vmem [#allocation3], %s609
        %p611 = pneg %p89
        %p612 = pneg %p86
        %s613 = sand.u32 %s102, 1
        %s614 = sand.u32 %s102, 1
        %s615 = smul.addr %s614, 64
        %s616 = scalar_lea.vmem [#allocation4], %s615
        %p617 = pneg %p115
        %p618 = pneg %p112
        %p619 = scmp.lt.s32.totalorder %s26, 3
        %s620 = scalar_select %p619, %s26, 3
        %s621 = smul.addr %s620, 8
        %s622 = scalar_lea.vmem %s4, %s621
        %p623 = pneg %p141
        %p624 = pneg %p138
        %p625 = scmp.lt.s32.totalorder %s26, 3
        %s626 = scalar_select %p625, %s26, 3
        %s627 = smul.addr %s626, 4
        %s628 = scalar_lea.vmem %s5, %s627
        %p629 = pneg %p167
        %p630 = pneg %p164
        %p631 = pneg %p188
        %p632 = pneg %p185
        %p633 = pneg %p209
        %p634 = pneg %p206
        %p635 = pneg %p230
        %p636 = pneg %p227
        %p637 = pneg %p251
        %p638 = pneg %p248
        %p639 = pneg %p272
        %p640 = pneg %p269
        %p641 = pneg %p298
        %p642 = pneg %p295
        %p643 = scmp.lt.s32.totalorder %s26, 3
        %s644 = scalar_select %p643, %s26, 3
        %s645 = smul.addr %s644, 8
        %s646 = scalar_lea.vmem %s11, %s645
        %p647 = pneg %p324
        %p648 = pneg %p321
        %p649 = scmp.lt.s32.totalorder %s26, 3
        %s650 = scalar_select %p649, %s26, 3
        %s651 = smul.addr %s650, 8
        %s652 = scalar_lea.vmem %s12, %s651
        %p653 = scmp.lt.s32.totalorder %s26, 3
        %s654 = scalar_select %p653, %s26, 3
        %s655 = smul.addr %s654, 8
        %s656 = scalar_lea.vmem %s4, %s655
        %p657 = scmp.lt.s32.totalorder %s26, 3
        %s658 = scalar_select %p657, %s26, 3
        %s659 = smul.addr %s658, 4
        %s660 = scalar_lea.vmem %s5, %s659
        %p661 = scmp.lt.s32.totalorder %s26, 3
        %s662 = scalar_select %p661, %s26, 3
        %s663 = smul.addr %s662, 8
        %s664 = scalar_lea.vmem %s11, %s663
        %p665 = scmp.lt.s32.totalorder %s26, 3
        %s666 = scalar_select %p665, %s26, 3
        %s667 = smul.addr %s666, 8
        %s668 = scalar_lea.vmem %s12, %s667
        %v670 = vld [vmem:[%s592] sm:$0xff]
        %v671 = vld [vmem:[%s592 + $0x8] sm:$0xff]
        %v672 = vld [vmem:[%s592 + $0x10] sm:$0xff]
        %v673 = vld [vmem:[%s592 + $0x18] sm:$0xff]
        %v674 = vld [vmem:[%s592 + $0x20] sm:$0xff]
        %v675 = vld [vmem:[%s592 + $0x28] sm:$0xff]
        %v676 = vld [vmem:[%s592 + $0x30] sm:$0xff]
        %v677 = vld [vmem:[%s592 + $0x38] sm:$0xff]
        %v678 = vld [vmem:[%s592 + $0x40] sm:$0xff]
        %v679 = vld [vmem:[%s592 + $0x48] sm:$0xff]
        %v680 = vld [vmem:[%s592 + $0x50] sm:$0xff]
        %v681 = vld [vmem:[%s592 + $0x58] sm:$0xff]
        %v682 = vld [vmem:[%s592 + $0x60] sm:$0xff]
        %v683 = vld [vmem:[%s592 + $0x68] sm:$0xff]
        %v684 = vld [vmem:[%s592 + $0x70] sm:$0xff]
        %v685 = vld [vmem:[%s592 + $0x78] sm:$0xff]
        %v686 = vld [vmem:[%s592 + $0x80] sm:$0xff]
        %v687 = vld [vmem:[%s592 + $0x88] sm:$0xff]
        %v688 = vld [vmem:[%s592 + $0x90] sm:$0xff]
        %v689 = vld [vmem:[%s592 + $0x98] sm:$0xff]
        %v690 = vld [vmem:[%s592 + $0xa0] sm:$0xff]
        %v691 = vld [vmem:[%s592 + $0xa8] sm:$0xff]
        %v692 = vld [vmem:[%s592 + $0xb0] sm:$0xff]
        %v693 = vld [vmem:[%s592 + $0xb8] sm:$0xff]
        %v694 = vld [vmem:[%s599] sm:$0xff]
        %v695 = vld [vmem:[%s599 + $0x8] sm:$0xff]
        %v696 = vld [vmem:[%s599 + $0x10] sm:$0xff]
        %v697 = vld [vmem:[%s599 + $0x18] sm:$0xff]
        %v698 = vld [vmem:[%s599 + $0x20] sm:$0xff]
        %v699 = vld [vmem:[%s599 + $0x28] sm:$0xff]
        %v700 = vld [vmem:[%s599 + $0x30] sm:$0xff]
        %v701 = vld [vmem:[%s599 + $0x38] sm:$0xff]
        %v702 = vld [vmem:[%s6] sm:$0xff]
        %v703 = vpack.c.bf16 %v671, %v670
        %v704 = vpack.c.bf16 %v673, %v672
        %v705 = vpack.c.bf16 %v675, %v674
        %v706 = vpack.c.bf16 %v677, %v676
        %v707 = vpack.c.bf16 %v679, %v678
        %v708 = vpack.c.bf16 %v681, %v680
        %v709 = vpack.c.bf16 %v683, %v682
        %v710 = vpack.c.bf16 %v685, %v684
        %v711 = vpack.c.bf16 %v687, %v686
        %v712 = vpack.c.bf16 %v689, %v688
        %v713 = vpack.c.bf16 %v691, %v690
        %v714 = vpack.c.bf16 %v693, %v692
        %v715 = vld [vmem:[%s7] sm:$0xf]
        %v716 = vpack.c.bf16 %v695, %v694
        %v717 = vpack.c.bf16 %v697, %v696
        %v718 = vpack.c.bf16 %v699, %v698
        %v719 = vpack.c.bf16 %v701, %v700
        %vm720 = vcmask 523264
        %v722 = vsel %vm720, %v715, 0
        %724 = vmatprep.subr.bf16.mxu0 0
        %725 = vmatpush1.bf16.msra.mxu0 0
        %726 = vmatprep.subr.bf16.mxu0 0
        %727 = vmatpush1.bf16.msra.mxu0 0
        %728 = vmatprep.subr.bf16.mxu0 0
        %729 = vmatpush1.bf16.msra.mxu0 0
        %730 = vmatprep.subr.bf16.mxu0 0
        %731 = vmatpush1.bf16.msra.mxu0 0
        %732 = vmatprep.subr.bf16.mxu0 0
        %733 = vmatpush1.bf16.msra.mxu0 %v719
        %734 = vmatprep.subr.bf16.mxu0 0
        %735 = vmatpush1.bf16.msra.mxu0 %v718
        %736 = vmatprep.subr.bf16.mxu0 0
        %737 = vmatpush1.bf16.msra.mxu0 %v717
        %738 = vmatprep.subr.bf16.mxu0 0
        %739 = vmatpush1.bf16.msra.mxu0 %v716
        %740 = vmatprep.subr.bf16.mxu0 0
        %741 = vmatpush2.bf16.msra.mxu0 0
        %742 = vmatprep.subr.bf16.mxu0 0
        %743 = vmatpush2.bf16.msra.mxu0 0
        %744 = vmatprep.subr.bf16.mxu0 0
        %745 = vmatpush2.bf16.msra.mxu0 0
        %746 = vmatprep.subr.bf16.mxu0 0
        %747 = vmatpush2.bf16.msra.mxu0 0
        %748 = vmatprep.subr.bf16.mxu0 0
        %749 = vmatpush2.bf16.msra.mxu0 0
        %750 = vmatprep.subr.bf16.mxu0 0
        %751 = vmatpush2.bf16.msra.mxu0 0
        %752 = vmatprep.subr.bf16.mxu0 0
        %753 = vmatpush2.bf16.msra.mxu0 0
        %754 = vmatprep.subr.bf16.mxu0 0
        %755 = vmatpush2.bf16.msra.mxu0 0
        %756 = vmatprep.mubr.bf16.mxu0 0
        %757 = vmatmul.mubr.bf16.gmra.mxu0 %v722
        %v758 = vpop.f32.mrf.mxu0
        %v759 = vadd.f32 0.0, %v758
        %v760 = vpop.f32.mrf.mxu0
        %v761 = vpop.f32.mrf.mxu0
        %v762 = vpop.f32.mrf.mxu0
        %763 = vdwg.mxu0
        %v765 = vunpack.c.l.b16 %v702
        %v766 = vunpack.c.h.b16 %v702
        %v767 = vpack.c.b16 %v765, %v765
        %v768 = vpack.c.b16 %v766, %v766
        %v771 = vsel %vm720, %v768, 0
        %773 = vmatprep.subr.bf16.mxu0 0
        %774 = vmatpush1.bf16.msra.mxu0 %v710
        %775 = vmatprep.subr.bf16.mxu0 0
        %776 = vmatpush1.bf16.msra.mxu0 %v709
        %777 = vmatprep.subr.bf16.mxu0 0
        %778 = vmatpush1.bf16.msra.mxu0 %v708
        %779 = vmatprep.subr.bf16.mxu0 0
        %780 = vmatpush1.bf16.msra.mxu0 %v707
        %781 = vmatprep.subr.bf16.mxu0 0
        %782 = vmatpush1.bf16.msra.mxu0 %v706
        %783 = vmatprep.subr.bf16.mxu0 0
        %784 = vmatpush1.bf16.msra.mxu0 %v705
        %785 = vmatprep.subr.bf16.mxu0 0
        %786 = vmatpush1.bf16.msra.mxu0 %v704
        %787 = vmatprep.subr.bf16.mxu0 0
        %788 = vmatpush1.bf16.msra.mxu0 %v703
        %789 = vmatprep.subr.bf16.mxu0 0
        %790 = vmatpush2.bf16.msra.mxu0 0
        %791 = vmatprep.subr.bf16.mxu0 0
        %792 = vmatpush2.bf16.msra.mxu0 0
        %793 = vmatprep.subr.bf16.mxu0 0
        %794 = vmatpush2.bf16.msra.mxu0 0
        %795 = vmatprep.subr.bf16.mxu0 0
        %796 = vmatpush2.bf16.msra.mxu0 0
        %797 = vmatprep.subr.bf16.mxu0 0
        %798 = vmatpush2.bf16.msra.mxu0 %v714
        %799 = vmatprep.subr.bf16.mxu0 0
        %800 = vmatpush2.bf16.msra.mxu0 %v713
        %801 = vmatprep.subr.bf16.mxu0 0
        %802 = vmatpush2.bf16.msra.mxu0 %v712
        %803 = vmatprep.subr.bf16.mxu0 0
        %804 = vmatpush2.bf16.msra.mxu0 %v711
        %805 = vmatprep.mubr.bf16.mxu0 %v771
        %806 = vmatmul.mubr.bf16.gmra.mxu0 %v767
        %v807 = vpop.f32.mrf.mxu0
        %v808 = vadd.f32 %v759, %v807
        %v809 = vpop.f32.mrf.mxu0
        %v810 = vpop.f32.mrf.mxu0
        %v811 = vpop.f32.mrf.mxu0
        %812 = vdwg.mxu0
        %v813 = vld [vmem:[%s8] sm:$0xf]
        %v814 = vpack.c.bf16 %v808, %v808
        %v815 = vld [vmem:[%s9] sm:$0xf]
        %v816 = vld [vmem:[%s660] sm:$0xf]
        %vm817 = vcmask 64512
        %v819 = vsel %vm817, %v815, 0
        %vm821 = vcmask 1043456
        %v823 = vsel %vm821, %v816, 0
        %825 = vmatprep.subr.bf16.mxu0 0
        %826 = vmatpush1.bf16.msra.mxu0 0
        %827 = vmatprep.subr.bf16.mxu0 0
        %828 = vmatpush1.bf16.msra.mxu0 0
        %829 = vmatprep.subr.bf16.mxu0 0
        %830 = vmatpush1.bf16.msra.mxu0 0
        %831 = vmatprep.subr.bf16.mxu0 0
        %832 = vmatpush1.bf16.msra.mxu0 0
        %833 = vmatprep.subr.bf16.mxu0 0
        %834 = vmatpush1.bf16.msra.mxu0 0
        %835 = vmatprep.subr.bf16.mxu0 0
        %836 = vmatpush1.bf16.msra.mxu0 0
        %837 = vmatprep.subr.bf16.mxu0 0
        %838 = vmatpush1.bf16.msra.mxu0 0
        %839 = vmatprep.subr.bf16.mxu0 0
        %840 = vmatpush1.bf16.msra.mxu0 %v823
        %841 = vmatprep.subr.bf16.mxu0 0
        %842 = vmatpush2.bf16.msra.mxu0 0
        %843 = vmatprep.subr.bf16.mxu0 0
        %844 = vmatpush2.bf16.msra.mxu0 0
        %845 = vmatprep.subr.bf16.mxu0 0
        %846 = vmatpush2.bf16.msra.mxu0 0
        %847 = vmatprep.subr.bf16.mxu0 0
        %848 = vmatpush2.bf16.msra.mxu0 0
        %849 = vmatprep.subr.bf16.mxu0 0
        %850 = vmatpush2.bf16.msra.mxu0 0
        %851 = vmatprep.subr.bf16.mxu0 0
        %852 = vmatpush2.bf16.msra.mxu0 0
        %853 = vmatprep.subr.bf16.mxu0 0
        %854 = vmatpush2.bf16.msra.mxu0 0
        %855 = vmatprep.subr.bf16.mxu0 0
        %856 = vmatpush2.bf16.msra.mxu0 0
        %857 = vmatprep.mubr.bf16.mxu0 0
        %858 = vmatmul.mubr.bf16.gmra.mxu0 %v819
        %v859 = vpop.f32.mrf.mxu0
        %v860 = vadd.f32 0.0, %v859
        %v861 = vpop.f32.mrf.mxu0
        %v862 = vpop.f32.mrf.mxu0
        %v863 = vpop.f32.mrf.mxu0
        %864 = vdwg.mxu0
        %v866 = vsel %vm817, %v813, 0
        %v869 = vsel %vm821, %v814, 0
        %871 = vmatprep.subr.bf16.mxu0 0
        %872 = vmatpush1.bf16.msra.mxu0 0
        %873 = vmatprep.subr.bf16.mxu0 0
        %874 = vmatpush1.bf16.msra.mxu0 0
        %875 = vmatprep.subr.bf16.mxu0 0
        %876 = vmatpush1.bf16.msra.mxu0 0
        %877 = vmatprep.subr.bf16.mxu0 0
        %878 = vmatpush1.bf16.msra.mxu0 0
        %879 = vmatprep.subr.bf16.mxu0 0
        %880 = vmatpush1.bf16.msra.mxu0 0
        %881 = vmatprep.subr.bf16.mxu0 0
        %882 = vmatpush1.bf16.msra.mxu0 0
        %883 = vmatprep.subr.bf16.mxu0 0
        %884 = vmatpush1.bf16.msra.mxu0 0
        %885 = vmatprep.subr.bf16.mxu0 0
        %886 = vmatpush1.bf16.msra.mxu0 %v869
        %887 = vmatprep.subr.bf16.mxu0 0
        %888 = vmatpush2.bf16.msra.mxu0 0
        %889 = vmatprep.subr.bf16.mxu0 0
        %890 = vmatpush2.bf16.msra.mxu0 0
        %891 = vmatprep.subr.bf16.mxu0 0
        %892 = vmatpush2.bf16.msra.mxu0 0
        %893 = vmatprep.subr.bf16.mxu0 0
        %894 = vmatpush2.bf16.msra.mxu0 0
        %895 = vmatprep.subr.bf16.mxu0 0
        %896 = vmatpush2.bf16.msra.mxu0 0
        %897 = vmatprep.subr.bf16.mxu0 0
        %898 = vmatpush2.bf16.msra.mxu0 0
        %899 = vmatprep.subr.bf16.mxu0 0
        %900 = vmatpush2.bf16.msra.mxu0 0
        %901 = vmatprep.subr.bf16.mxu0 0
        %902 = vmatpush2.bf16.msra.mxu0 0
        %903 = vmatprep.mubr.bf16.mxu0 0
        %904 = vmatmul.mubr.bf16.gmra.mxu0 %v866
        %v905 = vpop.f32.mrf.mxu0
        %v906 = vadd.f32 %v860, %v905
        %v907 = vpop.f32.mrf.mxu0
        %v908 = vpop.f32.mrf.mxu0
        %v909 = vpop.f32.mrf.mxu0
        %910 = vdwg.mxu0
        %v911 = vld [vmem:[%s1] sm:$0xff]
        %913 = vset.pattern.permute.xlu0 0
        %914 = vperm.xlu0 %913, %v911
        %v915 = vpop.permute.xlu0 %914
        %v917 = vadd.f32 %v906, %v915
        %v918 = vld [vmem:[#allocation2] sm:$0x1]
        %v919 = vld [vmem:[%s656] sm:$0xff]
        %v920 = vsub.f32 %v919, %v917
        %v922 = vlaneseq
        %v923 = vshrl.u32 %v922, 7
        %v924 = vsub.s32 0, %v923
        %v925 = vrot.slane %v918, %v924
        %926 = vset.pattern.permute.xlu0 0
        %927 = vperm.xlu0 %926, %v925
        %v928 = vpop.permute.xlu0 %927
        %v930 = vmul.f32 %v928, %v920
        %v931 = vadd.f32 %v808, %v930
        %v932 = vld [vmem:[%s10] sm:$0xf]
        %v933 = vld [vmem:[%s10 + $0x4] sm:$0xf]
        %v934 = vld [vmem:[%s10 + $0x8] sm:$0xf]
        %v935 = vld [vmem:[%s10 + $0xc] sm:$0xf]
        %v936 = vld [vmem:[%s10 + $0x10] sm:$0xf]
        %v937 = vld [vmem:[%s10 + $0x14] sm:$0xf]
        %v938 = vld [vmem:[%s10 + $0x18] sm:$0xf]
        %v939 = vld [vmem:[%s10 + $0x1c] sm:$0xf]
        %v940 = vld [vmem:[%s10 + $0x20] sm:$0xf]
        %v941 = vld [vmem:[%s10 + $0x24] sm:$0xf]
        %v942 = vld [vmem:[%s10 + $0x28] sm:$0xf]
        %v943 = vld [vmem:[%s10 + $0x2c] sm:$0xf]
        %v944 = vld [vmem:[%s10 + $0x30] sm:$0xf]
        %v945 = vld [vmem:[%s10 + $0x34] sm:$0xf]
        %v946 = vld [vmem:[%s10 + $0x38] sm:$0xf]
        %v947 = vld [vmem:[%s10 + $0x3c] sm:$0xf]
        %v948 = vld [vmem:[%s10 + $0x40] sm:$0xf]
        %v949 = vld [vmem:[%s10 + $0x44] sm:$0xf]
        %v950 = vld [vmem:[%s10 + $0x48] sm:$0xf]
        %v951 = vld [vmem:[%s10 + $0x4c] sm:$0xf]
        %v952 = vld [vmem:[%s10 + $0x50] sm:$0xf]
        %v953 = vld [vmem:[%s10 + $0x54] sm:$0xf]
        %v954 = vld [vmem:[%s10 + $0x58] sm:$0xf]
        %v955 = vld [vmem:[%s10 + $0x5c] sm:$0xf]
        %v956 = vpack.c.bf16 %v931, %v931
        %v981 = vunpack.c.l.b16 %v932
        %v982 = vunpack.c.l.b16 %v933
        %v983 = vunpack.c.l.b16 %v934
        %v984 = vunpack.c.l.b16 %v935
        %v985 = vunpack.c.l.b16 %v936
        %v986 = vunpack.c.l.b16 %v937
        %v987 = vunpack.c.l.b16 %v938
        %v988 = vunpack.c.l.b16 %v939
        %v989 = vunpack.c.l.b16 %v940
        %v990 = vunpack.c.l.b16 %v941
        %v991 = vunpack.c.l.b16 %v942
        %v992 = vunpack.c.l.b16 %v943
        %v993 = vunpack.c.l.b16 %v944
        %v994 = vunpack.c.l.b16 %v945
        %v995 = vunpack.c.l.b16 %v946
        %v996 = vunpack.c.l.b16 %v947
        %v997 = vunpack.c.l.b16 %v948
        %v998 = vunpack.c.l.b16 %v949
        %v999 = vunpack.c.l.b16 %v950
        %v1000 = vunpack.c.l.b16 %v951
        %v1001 = vunpack.c.l.b16 %v952
        %v1002 = vunpack.c.l.b16 %v953
        %v1003 = vunpack.c.l.b16 %v954
        %v1004 = vunpack.c.l.b16 %v955
        %v1005 = vpack.c.b16 %v982, %v981
        %v1006 = vpack.c.b16 %v984, %v983
        %v1007 = vpack.c.b16 %v986, %v985
        %v1008 = vpack.c.b16 %v988, %v987
        %v1009 = vpack.c.b16 %v990, %v989
        %v1010 = vpack.c.b16 %v992, %v991
        %v1011 = vpack.c.b16 %v994, %v993
        %v1012 = vpack.c.b16 %v996, %v995
        %v1013 = vpack.c.b16 %v998, %v997
        %v1014 = vpack.c.b16 %v1000, %v999
        %v1015 = vpack.c.b16 %v1002, %v1001
        %v1016 = vpack.c.b16 %v1004, %v1003
        %v1018 = vsel %vm817, %v1005, 0
        %v1021 = vsel %vm817, %v1006, 0
        %v1024 = vsel %vm817, %v1007, 0
        %v1027 = vsel %vm817, %v1008, 0
        %v1030 = vsel %vm817, %v1009, 0
        %v1033 = vsel %vm817, %v1010, 0
        %v1036 = vsel %vm817, %v1011, 0
        %v1039 = vsel %vm817, %v1012, 0
        %v1042 = vsel %vm817, %v1013, 0
        %v1045 = vsel %vm817, %v1014, 0
        %v1048 = vsel %vm817, %v1015, 0
        %v1051 = vsel %vm817, %v1016, 0
        %v1054 = vsel %vm821, %v956, 0
        %1056 = vmatprep.subr.bf16.mxu0 0
        %1057 = vmatpush1.bf16.msra.mxu0 0
        %1058 = vmatprep.subr.bf16.mxu0 0
        %1059 = vmatpush1.bf16.msra.mxu0 0
        %1060 = vmatprep.subr.bf16.mxu0 0
        %1061 = vmatpush1.bf16.msra.mxu0 0
        %1062 = vmatprep.subr.bf16.mxu0 0
        %1063 = vmatpush1.bf16.msra.mxu0 0
        %1064 = vmatprep.subr.bf16.mxu0 0
        %1065 = vmatpush1.bf16.msra.mxu0 0
        %1066 = vmatprep.subr.bf16.mxu0 0
        %1067 = vmatpush1.bf16.msra.mxu0 0
        %1068 = vmatprep.subr.bf16.mxu0 0
        %1069 = vmatpush1.bf16.msra.mxu0 0
        %1070 = vmatprep.subr.bf16.mxu0 0
        %1071 = vmatpush1.bf16.msra.mxu0 %v1054
        %1072 = vmatprep.subr.bf16.mxu0 0
        %1073 = vmatpush2.bf16.msra.mxu0 0
        %1074 = vmatprep.subr.bf16.mxu0 0
        %1075 = vmatpush2.bf16.msra.mxu0 0
        %1076 = vmatprep.subr.bf16.mxu0 0
        %1077 = vmatpush2.bf16.msra.mxu0 0
        %1078 = vmatprep.subr.bf16.mxu0 0
        %1079 = vmatpush2.bf16.msra.mxu0 0
        %1080 = vmatprep.subr.bf16.mxu0 0
        %1081 = vmatpush2.bf16.msra.mxu0 0
        %1082 = vmatprep.subr.bf16.mxu0 0
        %1083 = vmatpush2.bf16.msra.mxu0 0
        %1084 = vmatprep.subr.bf16.mxu0 0
        %1085 = vmatpush2.bf16.msra.mxu0 0
        %1086 = vmatprep.subr.bf16.mxu0 0
        %1087 = vmatpush2.bf16.msra.mxu0 0
        %1088 = vmatprep.mubr.bf16.mxu0 0
        %1089 = vmatmul.mubr.bf16.gmra.mxu0 %v1018
        %v1090 = vpop.f32.mrf.mxu0
        %v1091 = vadd.f32 0.0, %v1090
        %v1092 = vpop.f32.mrf.mxu0
        %v1093 = vpop.f32.mrf.mxu0
        %v1094 = vadd.f32 0.0, %v1093
        %v1095 = vpop.f32.mrf.mxu0
        %1096 = vmatprep.mubr.bf16.mxu0 0
        %1097 = vmatmul.mubr.bf16.gmra.mxu0 %v1021
        %v1098 = vpop.f32.mrf.mxu0
        %v1099 = vadd.f32 0.0, %v1098
        %v1100 = vpop.f32.mrf.mxu0
        %v1101 = vpop.f32.mrf.mxu0
        %v1102 = vadd.f32 0.0, %v1101
        %v1103 = vpop.f32.mrf.mxu0
        %1104 = vmatprep.mubr.bf16.mxu0 0
        %1105 = vmatmul.mubr.bf16.gmra.mxu0 %v1024
        %v1106 = vpop.f32.mrf.mxu0
        %v1107 = vadd.f32 0.0, %v1106
        %v1108 = vpop.f32.mrf.mxu0
        %v1109 = vpop.f32.mrf.mxu0
        %v1110 = vadd.f32 0.0, %v1109
        %v1111 = vpop.f32.mrf.mxu0
        %1112 = vmatprep.mubr.bf16.mxu0 0
        %1113 = vmatmul.mubr.bf16.gmra.mxu0 %v1027
        %v1114 = vpop.f32.mrf.mxu0
        %v1115 = vadd.f32 0.0, %v1114
        %v1116 = vpop.f32.mrf.mxu0
        %v1117 = vpop.f32.mrf.mxu0
        %v1118 = vadd.f32 0.0, %v1117
        %v1119 = vpop.f32.mrf.mxu0
        %1120 = vmatprep.mubr.bf16.mxu0 0
        %1121 = vmatmul.mubr.bf16.gmra.mxu0 %v1030
        %v1122 = vpop.f32.mrf.mxu0
        %v1123 = vadd.f32 0.0, %v1122
        %v1124 = vpop.f32.mrf.mxu0
        %v1125 = vpop.f32.mrf.mxu0
        %v1126 = vadd.f32 0.0, %v1125
        %v1127 = vpop.f32.mrf.mxu0
        %1128 = vmatprep.mubr.bf16.mxu0 0
        %1129 = vmatmul.mubr.bf16.gmra.mxu0 %v1033
        %v1130 = vpop.f32.mrf.mxu0
        %v1131 = vadd.f32 0.0, %v1130
        %v1132 = vpop.f32.mrf.mxu0
        %v1133 = vpop.f32.mrf.mxu0
        %v1134 = vadd.f32 0.0, %v1133
        %v1135 = vpop.f32.mrf.mxu0
        %1136 = vmatprep.mubr.bf16.mxu0 0
        %1137 = vmatmul.mubr.bf16.gmra.mxu0 %v1036
        %v1138 = vpop.f32.mrf.mxu0
        %v1139 = vadd.f32 0.0, %v1138
        %v1140 = vpop.f32.mrf.mxu0
        %v1141 = vpop.f32.mrf.mxu0
        %v1142 = vadd.f32 0.0, %v1141
        %v1143 = vpop.f32.mrf.mxu0
        %1144 = vmatprep.mubr.bf16.mxu0 0
        %1145 = vmatmul.mubr.bf16.gmra.mxu0 %v1039
        %v1146 = vpop.f32.mrf.mxu0
        %v1147 = vadd.f32 0.0, %v1146
        %v1148 = vpop.f32.mrf.mxu0
        %v1149 = vpop.f32.mrf.mxu0
        %v1150 = vadd.f32 0.0, %v1149
        %v1151 = vpop.f32.mrf.mxu0
        %1152 = vmatprep.mubr.bf16.mxu0 0
        %1153 = vmatmul.mubr.bf16.gmra.mxu0 %v1042
        %v1154 = vpop.f32.mrf.mxu0
        %v1155 = vadd.f32 0.0, %v1154
        %v1156 = vpop.f32.mrf.mxu0
        %v1157 = vpop.f32.mrf.mxu0
        %v1158 = vadd.f32 0.0, %v1157
        %v1159 = vpop.f32.mrf.mxu0
        %1160 = vmatprep.mubr.bf16.mxu0 0
        %1161 = vmatmul.mubr.bf16.gmra.mxu0 %v1045
        %v1162 = vpop.f32.mrf.mxu0
        %v1163 = vadd.f32 0.0, %v1162
        %v1164 = vpop.f32.mrf.mxu0
        %v1165 = vpop.f32.mrf.mxu0
        %v1166 = vadd.f32 0.0, %v1165
        %v1167 = vpop.f32.mrf.mxu0
        %1168 = vmatprep.mubr.bf16.mxu0 0
        %1169 = vmatmul.mubr.bf16.gmra.mxu0 %v1048
        %v1170 = vpop.f32.mrf.mxu0
        %v1171 = vadd.f32 0.0, %v1170
        %v1172 = vpop.f32.mrf.mxu0
        %v1173 = vpop.f32.mrf.mxu0
        %v1174 = vadd.f32 0.0, %v1173
        %v1175 = vpop.f32.mrf.mxu0
        %1176 = vmatprep.mubr.bf16.mxu0 0
        %1177 = vmatmul.mubr.bf16.gmra.mxu0 %v1051
        %v1178 = vpop.f32.mrf.mxu0
        %v1179 = vadd.f32 0.0, %v1178
        %v1180 = vpop.f32.mrf.mxu0
        %v1181 = vpop.f32.mrf.mxu0
        %v1182 = vadd.f32 0.0, %v1181
        %v1183 = vpop.f32.mrf.mxu0
        %1184 = vdwg.mxu0
        %v1185 = vlaneseq
        %v1186 = vshrl.u32 %v1185, 7
        %vm1187 = vcmp.lt.s32.totalorder %v1186, 4
        %v1188 = vmul.f32 %v930, %v930
        %v1189 = vsel %vm1187, %v1188, 0.0
        %1190 = vadd.xlane.f32.xlu0 %v1189
        %v1191 = vpop.xlane.xlu0 %1190
        %v1192 = vrot.slane %v1191, 4
        %v1193 = vadd.f32 %v1191, %v1192
        %v1194 = vrot.slane %v1193, 2
        %v1195 = vadd.f32 %v1193, %v1194
        %v1196 = vrot.slane %v1195, 1
        %v1197 = vadd.f32 %v1195, %v1196
        %s1198 = vtos %v1197
        %v1199 = vsub.f32 %v1091, %v670
        %v1200 = vsub.f32 %v1094, %v671
        %v1201 = vsub.f32 %v1099, %v672
        %v1202 = vsub.f32 %v1102, %v673
        %v1203 = vsub.f32 %v1107, %v674
        %v1204 = vsub.f32 %v1110, %v675
        %v1205 = vsub.f32 %v1115, %v676
        %v1206 = vsub.f32 %v1118, %v677
        %v1207 = vsub.f32 %v1123, %v678
        %v1208 = vsub.f32 %v1126, %v679
        %v1209 = vsub.f32 %v1131, %v680
        %v1210 = vsub.f32 %v1134, %v681
        %v1211 = vsub.f32 %v1139, %v682
        %v1212 = vsub.f32 %v1142, %v683
        %v1213 = vsub.f32 %v1147, %v684
        %v1214 = vsub.f32 %v1150, %v685
        %v1215 = vsub.f32 %v1155, %v686
        %v1216 = vsub.f32 %v1158, %v687
        %v1217 = vsub.f32 %v1163, %v688
        %v1218 = vsub.f32 %v1166, %v689
        %v1219 = vsub.f32 %v1171, %v690
        %v1220 = vsub.f32 %v1174, %v691
        %v1221 = vsub.f32 %v1179, %v692
        %v1222 = vsub.f32 %v1182, %v693
        %v1223 = vmul.f32 %v1199, %v1199
        %v1224 = vmul.f32 %v1200, %v1200
        %v1225 = vmul.f32 %v1201, %v1201
        %v1226 = vmul.f32 %v1202, %v1202
        %v1227 = vmul.f32 %v1203, %v1203
        %v1228 = vmul.f32 %v1204, %v1204
        %v1229 = vmul.f32 %v1205, %v1205
        %v1230 = vmul.f32 %v1206, %v1206
        %v1231 = vmul.f32 %v1207, %v1207
        %v1232 = vmul.f32 %v1208, %v1208
        %v1233 = vmul.f32 %v1209, %v1209
        %v1234 = vmul.f32 %v1210, %v1210
        %v1235 = vmul.f32 %v1211, %v1211
        %v1236 = vmul.f32 %v1212, %v1212
        %v1237 = vmul.f32 %v1213, %v1213
        %v1238 = vmul.f32 %v1214, %v1214
        %v1239 = vmul.f32 %v1215, %v1215
        %v1240 = vmul.f32 %v1216, %v1216
        %v1241 = vmul.f32 %v1217, %v1217
        %v1242 = vmul.f32 %v1218, %v1218
        %v1243 = vmul.f32 %v1219, %v1219
        %v1244 = vmul.f32 %v1220, %v1220
        %v1245 = vmul.f32 %v1221, %v1221
        %v1246 = vmul.f32 %v1222, %v1222
        %v1247 = vadd.f32 %v1223, %v1224
        %v1248 = vadd.f32 %v1247, %v1225
        %v1249 = vadd.f32 %v1248, %v1226
        %v1250 = vadd.f32 %v1249, %v1227
        %v1251 = vadd.f32 %v1250, %v1228
        %v1252 = vadd.f32 %v1251, %v1229
        %v1253 = vadd.f32 %v1252, %v1230
        %v1254 = vadd.f32 %v1253, %v1231
        %v1255 = vadd.f32 %v1254, %v1232
        %v1256 = vadd.f32 %v1255, %v1233
        %v1257 = vadd.f32 %v1256, %v1234
        %v1258 = vadd.f32 %v1257, %v1235
        %v1259 = vadd.f32 %v1258, %v1236
        %v1260 = vadd.f32 %v1259, %v1237
        %v1261 = vadd.f32 %v1260, %v1238
        %v1262 = vadd.f32 %v1261, %v1239
        %v1263 = vadd.f32 %v1262, %v1240
        %v1264 = vadd.f32 %v1263, %v1241
        %v1265 = vadd.f32 %v1264, %v1242
        %v1266 = vadd.f32 %v1265, %v1243
        %v1267 = vadd.f32 %v1266, %v1244
        %v1268 = vadd.f32 %v1267, %v1245
        %v1269 = vadd.f32 %v1268, %v1246
        %1270 = vadd.xlane.f32.xlu0 %v1269
        %v1271 = vpop.xlane.xlu0 %1270
        %v1272 = vrot.slane %v1271, 4
        %v1273 = vadd.f32 %v1271, %v1272
        %v1274 = vrot.slane %v1273, 2
        %v1275 = vadd.f32 %v1273, %v1274
        %v1276 = vrot.slane %v1275, 1
        %v1277 = vadd.f32 %v1275, %v1276
        %s1278 = vtos %v1277
        %v1279 = vstv %s1198
        %1280 = vst [vmem:[%s664] sm:$0xff] %v1279
        %v1281 = vstv %s1278
        %1282 = vst [vmem:[%s668] sm:$0xff] %v1281
        %p1283 = scmp.lt.s32.totalorder %s26, 3
        %s1284 = scalar_select %p1283, %s26, 3
        %s1285 = smul.addr %s1284, 8
        %s1286 = scalar_lea.vmem %s11, %s1285
        %p1287 = scmp.lt.s32.totalorder %s26, 3
        %s1288 = scalar_select %p1287, %s26, 3
        %s1289 = smul.addr %s1288, 8
        %s1290 = scalar_lea.vmem %s12, %s1289
        // Predicated region
        $region141: #{train_step.3} parent=131 // pred_check
          %p1291 = pneg %p295
        $region142: #{train_step.3} parent=131 // pred_check_branch
          %1293 = sbr.rel (%p1291) target = $region144
        $region143: #{train_step.3} parent=131 // pred_region
          _
        $region144: #{train_step.3} parent=131 // pred_fallthru
          _
        // Predicated region
        $region145: #{train_step.3} parent=131 // pred_check
          %p1294 = pneg %p321
        $region146: #{train_step.3} parent=131 // pred_check_branch
          %1296 = sbr.rel (%p1294) target = $region148
        $region147: #{train_step.3} parent=131 // pred_region
          _
        $region148: #{train_step.3} parent=131 // pred_fallthru
          _
      $region132: #{train_step.3} parent=5 // pred_fallthru
        _
      %p1297 = scmp.le.s32.totalorder 2, %s21
      // Predicated region
      $region149: #{train_step.3} parent=5 // pred_check
        %p1298 = pneg %p1297
      $region150: #{train_step.3} parent=5 // pred_check_branch
        %1300 = sbr.rel (%p1298) target = $region152
      $region151: #{train_step.3} parent=5 // pred_region
        %s1301 = ssub.s32 %s21, 2
        // Predicated region
        $region153: #{train_step.3} parent=151 // pred_check
          %p1302 = pneg %p301
        $region154: #{train_step.3} parent=151 // pred_check_branch
          %1304 = sbr.rel (%p1302) target = $region156
        $region155: #{train_step.3} parent=151 // pred_region
          %p1305 = scmp.lt.s32.totalorder %s27, 3
          %s1306 = scalar_select %p1305, %s27, 3
          %s1307 = smul.addr %s1306, 8
          %s1308 = scalar_lea.vmem %s11, %s1307
        $region156: #{train_step.3} parent=151 // pred_fallthru
          _
        // Predicated region
        $region157: #{train_step.3} parent=151 // pred_check
          %p1309 = pneg %p327
        $region158: #{train_step.3} parent=151 // pred_check_branch
          %1311 = sbr.rel (%p1309) target = $region160
        $region159: #{train_step.3} parent=151 // pred_region
          %p1312 = scmp.lt.s32.totalorder %s27, 3
          %s1313 = scalar_select %p1312, %s27, 3
          %s1314 = smul.addr %s1313, 8
          %s1315 = scalar_lea.vmem %s12, %s1314
        $region160: #{train_step.3} parent=151 // pred_fallthru
          _
      $region152: #{train_step.3} parent=5 // pred_fallthru
        _
    $region6: #{train_step.3} parent=1 // loop_footer
      %s25 = sadd.s32 1, %s21
    $region7: #{train_step.3} parent=1 // loop_footer_branch
      %20 = sbr.rel target = $region3
    $region8: #{train_step.3} parent=1 // loop_exit
      _

</llo_original>
